<compile_context>
chip_gen: v5e
topology: v5e:2x2
jax: 0.10.0
libtpu: 0.0.40
codegen_flags: <defaults>
</compile_context>

<pallas_src>
import functools

import jax
import jax.numpy as jnp
from jax.experimental import pallas as pl
from jax.experimental.pallas import tpu as pltpu


# ---------------------------------------------------------------------------
# Helpers
# ---------------------------------------------------------------------------
def _spec2(shape):
    # Whole-array 2-D block, single grid step.  index_map also receives the
    # scalar-prefetched perm ref (positional trailing arg) and ignores it.
    return pl.BlockSpec(shape, lambda i, perm: (0, 0))


def _vmem_limit_bytes():
    # Per-generation scoped-VMEM budget: ~100 MiB headroomed on v5e/v6e
    # (128 MiB physical), ~48 MiB on v7x (64 MiB physical).
    try:
        phys = int(pltpu.get_tpu_info().vmem_capacity_bytes)
    except Exception:
        phys = 64 * 1024 * 1024
    return int(min(phys - 16 * 1024 * 1024, 100 * 1024 * 1024))


# ---------------------------------------------------------------------------
# Fused forward kernel
# ---------------------------------------------------------------------------
def _hero_fused_kernel(
    # scalar prefetch (SMEM)
    perm_ref,
    # inputs
    x_ref, adj_hbm_ref,
    e1w_ref, e1b_ref, e2w_ref, e2b_ref, e3w_ref, e3b_ref, zw_ref, zb_ref,
    d1w_ref, d1b_ref, d2w_ref, d2b_ref, d3w_ref, d3b_ref, xbw_ref, xbb_ref,
    g1w_ref, g2w_ref, g3w_ref, g4w_ref, g5w_ref, clu_ref,
    # outputs
    slab_ref, summ_ref,
    # scratch
    adj_vmem, adj_sem,
    *, v,
):
    f32 = jnp.float32
    bf16 = jnp.bfloat16
    sigma = 0.5
    n = x_ref.shape[0]

    # Kick off the adj HBM->VMEM DMA; the AE chain below (which never touches
    # adj) hides it.
    adj_cp = pltpu.make_async_copy(adj_hbm_ref, adj_vmem, adj_sem)
    adj_cp.start()

    def lin(xv, w_ref, b_ref, relu):
        # bf16 MXU inputs, f32 accumulation, f32 bias add.
        y = jnp.dot(xv.astype(bf16), w_ref[...], preferred_element_type=f32)
        y = y + b_ref[...]
        return jnp.maximum(y, 0.0) if relu else y

    def mm(xv, w_ref):
        return jnp.dot(xv.astype(bf16), w_ref[...], preferred_element_type=f32)

    x = x_ref[...]                                        # (N, n_input) f32

    # --- corruption(): in-kernel row gather from the resident x using the
    # scalar-prefetched permutation.  Unrolled (n is small & static here).
    # TODO(synk): for large N switch to a fori_loop / DMA gather.
    neg_rows = [x_ref[pl.ds(perm_ref[i], 1), :] for i in range(n)]
    xx = jnp.concatenate([x] + neg_rows, axis=0)          # (2N, n_input)

    # --- shared AE encoder: pos + neg batched along rows through the shared
    # weights (better sublane fill, one weight stage per layer).
    t1 = lin(xx, e1w_ref, e1b_ref, True)
    t2 = lin(t1, e2w_ref, e2b_ref, True)
    t3 = lin(t2, e3w_ref, e3b_ref, True)
    tra1, ntra1 = t1[:n], t1[n:]
    tra2, ntra2 = t2[:n], t2[n:]
    tra3, ntra3 = t3[:n], t3[n:]

    # z-layer + decoder only needed for the positive branch (the corrupted
    # branch's z / decoder outputs are discarded in the reference forward).
    z = lin(tra3, zw_ref, zb_ref, False)
    d1 = lin(z, d1w_ref, d1b_ref, True)
    d2 = lin(d1, d2w_ref, d2b_ref, True)
    d3 = lin(d2, d3w_ref, d3b_ref, True)
    x_bar = lin(d3, xbw_ref, xbb_ref, False)

    # --- adj is needed from here on: the DMA had ~11 matmuls to hide behind.
    adj_cp.wait()
    adj = adj_vmem[...]                                   # (N, N) bf16

    def agg(sup, relu):
        y = jnp.dot(adj, sup.astype(bf16), preferred_element_type=f32)
        return jnp.maximum(y, 0.0) if relu else y

    # GCN layer 1: the reference feeds the CLEAN x to gnn_1 in BOTH branches,
    # so it is computed once and reused.
    h1 = agg(mm(x, g1w_ref), True)

    # Layers 2/3: pos & neg share weights -> one row-stacked support matmul
    # plus one lane-concatenated adj aggregation (wide MXU pass) per layer.
    e2_ = g2w_ref.shape[1]
    mix2 = jnp.concatenate([(1.0 - sigma) * h1 + sigma * tra1,
                            (1.0 - sigma) * h1 + sigma * ntra1], axis=0)
    sup2 = mm(mix2, g2w_ref)                              # (2N, E2)
    a2 = agg(jnp.concatenate([sup2[:n], sup2[n:]], axis=1), True)   # (N, 2E2)
    h2, nh2 = a2[:, :e2_], a2[:, e2_:]

    e3_ = g3w_ref.shape[1]
    mix3 = jnp.concatenate([(1.0 - sigma) * h2 + sigma * tra2,
                            (1.0 - sigma) * nh2 + sigma * ntra2], axis=0)
    sup3 = mm(mix3, g3w_ref)
    a3 = agg(jnp.concatenate([sup3[:n], sup3[n:]], axis=1), True)
    h3, nh3 = a3[:, :e3_], a3[:, e3_:]

    out_h = (1.0 - sigma) * h3 + sigma * tra3
    neg_h = (1.0 - sigma) * nh3 + sigma * ntra3

    # Positive-only layers 4/5.
    h4 = agg(mm(out_h, g4w_ref), True)
    h5 = agg(mm((1.0 - sigma) * h4 + sigma * z, g5w_ref), False)    # logits

    # Softmax over clusters (EUP reciprocal frees VALU slots).
    m = jnp.max(h5, axis=1, keepdims=True)
    e = jnp.exp(h5 - m)
    pred = e * pl.reciprocal(jnp.sum(e, axis=1, keepdims=True), approx=True)

    # Summarizer: numerically-stable sigmoid(mean over nodes).
    mean = jnp.mean(out_h, axis=0, keepdims=True)
    en = jnp.exp(-jnp.abs(mean))
    r = pl.reciprocal(1.0 + en, approx=True)
    summ = jnp.where(mean >= 0.0, r, en * r)

    # Student-t soft assignment q (tiny z @ c.T kept in f32).
    c = clu_ref[...]                                      # (K, nz)
    z2 = jnp.sum(z * z, axis=1, keepdims=True)            # (N, 1)
    c2 = jnp.sum(c * c, axis=1, keepdims=True).T          # (1, K)
    zc = jnp.dot(z, c.T, preferred_element_type=f32)      # (N, K)
    dist = jnp.maximum(z2 + c2 - 2.0 * zc, 0.0)
    q = pl.reciprocal(1.0 + dist * (1.0 / v), approx=True)
    if v != 1.0:        # static branch: the pow is skipped entirely for v == 1
        q = q ** ((v + 1.0) / 2.0)
    q = q * pl.reciprocal(jnp.sum(q, axis=1, keepdims=True), approx=True)

    # --- lane-dense packed store: all (N, *) outputs go out as one unmasked
    # full-width slab; the wrapper slices it apart.
    parts = [h5, pred, q, z, out_h, neg_h, x_bar]
    total = sum(p.shape[1] for p in parts)
    pad = slab_ref.shape[1] - total
    if pad:
        parts.append(jnp.zeros((n, pad), f32))
    slab_ref[...] = jnp.concatenate(parts, axis=1)
    summ_ref[...] = summ


# ---------------------------------------------------------------------------
# Wrapper
# ---------------------------------------------------------------------------
def hero_gcn_forward(params, x, adj, perm, v=1.0):
    n, n_input = x.shape
    n_enc_3 = params["enc3_w"].shape[1]
    n_z = params["z_w"].shape[1]
    n_clusters = params["gnn5_w"].shape[1]

    f32 = jnp.float32
    bf16 = jnp.bfloat16

    def b2(b):
        return b.reshape(1, -1).astype(f32)

    def w16(w):
        return w.astype(bf16)

    # adj in bf16: halves its HBM DMA bytes and VMEM residency; accumulation
    # stays f32 inside the kernel.
    adj_bf16 = adj.astype(bf16)

    operands = [
        x.astype(f32), adj_bf16,
        w16(params["enc1_w"]), b2(params["enc1_b"]),
        w16(params["enc2_w"]), b2(params["enc2_b"]),
        w16(params["enc3_w"]), b2(params["enc3_b"]),
        w16(params["z_w"]), b2(params["z_b"]),
        w16(params["dec1_w"]), b2(params["dec1_b"]),
        w16(params["dec2_w"]), b2(params["dec2_b"]),
        w16(params["dec3_w"]), b2(params["dec3_b"]),
        w16(params["xbar_w"]), b2(params["xbar_b"]),
        w16(params["gnn1_w"]), w16(params["gnn2_w"]), w16(params["gnn3_w"]),
        w16(params["gnn4_w"]), w16(params["gnn5_w"]),
        params["cluster_layer"].astype(f32),
    ]

    in_specs = []
    for idx, op in enumerate(operands):
        if idx == 1:  # adj: raw HBM ref, manually DMA'd inside the kernel
            in_specs.append(pl.BlockSpec(memory_space=pl.ANY))
        else:
            in_specs.append(_spec2(op.shape))

    widths = [n_clusters, n_clusters, n_clusters, n_z, n_enc_3, n_enc_3, n_input]
    total = sum(widths)
    slab_w = ((total + 127) // 128) * 128          # lane-dense, unmasked store

    out_shapes = (
        jax.ShapeDtypeStruct((n, slab_w), f32),    # [h|pred|q|z|out_h|neg_h|x_bar|pad]
        jax.ShapeDtypeStruct((1, n_enc_3), f32),   # summary
    )
    out_specs = [_spec2((n, slab_w)), _spec2((1, n_enc_3))]

    grid_spec = pltpu.PrefetchScalarGridSpec(
        num_scalar_prefetch=1,                     # perm -> SMEM
        grid=(1,),
        in_specs=in_specs,
        out_specs=out_specs,
        scratch_shapes=[
            pltpu.VMEM((n, n), bf16),              # adj landing buffer
            pltpu.SemaphoreType.DMA(()),           # adj DMA completion
        ],
    )

    slab, summary = pl.pallas_call(
        functools.partial(_hero_fused_kernel, v=float(v)),
        out_shape=out_shapes,
        grid_spec=grid_spec,
        compiler_params=pltpu.CompilerParams(
            dimension_semantics=("arbitrary",),
            vmem_limit_bytes=_vmem_limit_bytes(),
        ),
    )(perm.astype(jnp.int32), *operands)

    # Slice the packed slab apart (pure layout plumbing, no compute).
    offs, o = [], 0
    for w in widths:
        offs.append(o)
        o += w
    h       = slab[:, offs[0]:offs[0] + n_clusters]
    predict = slab[:, offs[1]:offs[1] + n_clusters]
    q       = slab[:, offs[2]:offs[2] + n_clusters]
    z       = slab[:, offs[3]:offs[3] + n_z]
    out_h   = slab[:, offs[4]:offs[4] + n_enc_3]
    neg_h   = slab[:, offs[5]:offs[5] + n_enc_3]
    x_bar   = slab[:, offs[6]:offs[6] + n_input]
    return h, out_h, neg_h, summary.reshape(-1), x_bar, q, predict, z


# ---------------------------------------------------------------------------
# Deterministic parameter construction
# ---------------------------------------------------------------------------
def init_params(key, dims):
    (n_enc_1, n_enc_2, n_enc_3, n_dec_1, n_dec_2, n_dec_3,
     n_input, n_z, n_clusters) = dims

    keys = iter(jax.random.split(key, 32))

    def lin(din, dout):
        w = jax.random.normal(next(keys), (din, dout), jnp.float32) * (1.0 / jnp.sqrt(din))
        b = jnp.zeros((dout,), jnp.float32)
        return w, b

    def gnn(din, dout):
        lim = jnp.sqrt(6.0 / (din + dout))
        return jax.random.uniform(next(keys), (din, dout), jnp.float32, -lim, lim)

    p = {}
    p["enc1_w"], p["enc1_b"] = lin(n_input, n_enc_1)
    p["enc2_w"], p["enc2_b"] = lin(n_enc_1, n_enc_2)
    p["enc3_w"], p["enc3_b"] = lin(n_enc_2, n_enc_3)
    p["z_w"], p["z_b"] = lin(n_enc_3, n_z)
    p["dec1_w"], p["dec1_b"] = lin(n_z, n_dec_1)
    p["dec2_w"], p["dec2_b"] = lin(n_dec_1, n_dec_2)
    p["dec3_w"], p["dec3_b"] = lin(n_dec_2, n_dec_3)
    p["xbar_w"], p["xbar_b"] = lin(n_dec_3, n_input)

    p["gnn1_w"] = gnn(n_input, n_enc_1)
    p["gnn2_w"] = gnn(n_enc_1, n_enc_2)
    p["gnn3_w"] = gnn(n_enc_2, n_enc_3)
    p["gnn4_w"] = gnn(n_enc_3, n_z)
    p["gnn5_w"] = gnn(n_z, n_clusters)

    # xavier_normal for cluster_layer
    std = jnp.sqrt(2.0 / (n_clusters + n_z))
    p["cluster_layer"] = jax.random.normal(next(keys), (n_clusters, n_z), jnp.float32) * std

    # self.weight is only used in discriminate()/loss(), not in forward().
    p["disc_weight"] = jax.random.normal(next(keys), (n_enc_3, n_enc_3), jnp.float32) * 0.1
    return p


# ---------------------------------------------------------------------------
if __name__ == "__main__":
    # Small deterministic configuration.
    N = 8
    n_input = 16
    n_enc_1, n_enc_2, n_enc_3 = 32, 32, 16
    n_dec_1, n_dec_2, n_dec_3 = 16, 32, 32
    n_z = 8
    n_clusters = 4
    v = 1.0

    key = jax.random.PRNGKey(0)
    k_param, k_x, k_adj, k_perm = jax.random.split(key, 4)

    params = init_params(
        k_param,
        (n_enc_1, n_enc_2, n_enc_3, n_dec_1, n_dec_2, n_dec_3,
         n_input, n_z, n_clusters),
    )

    x = jax.random.normal(k_x, (N, n_input), jnp.float32)

    # Symmetric, row-normalized non-negative adjacency (typical GCN input).
    a = jax.random.uniform(k_adj, (N, N), jnp.float32)
    a = (a + a.T) * 0.5 + jnp.eye(N, dtype=jnp.float32)
    adj = a / jnp.sum(a, axis=1, keepdims=True)

    # corruption(): deterministic row permutation (torch.randperm equivalent).
    perm = jax.random.permutation(k_perm, N)

    outs = hero_gcn_forward(params, x, adj, perm, v=v)
    outs = jax.block_until_ready(outs)

    h, out_h, neg_h, summary, x_bar, q, predict, z = outs
    assert h.shape == (N, n_clusters)
    assert out_h.shape == (N, n_enc_3)
    assert neg_h.shape == (N, n_enc_3)
    assert summary.shape == (n_enc_3,)
    assert x_bar.shape == (N, n_input)
    assert q.shape == (N, n_clusters)
    assert predict.shape == (N, n_clusters)
    assert z.shape == (N, n_z)
    assert bool(jnp.all(jnp.isfinite(h)))
    assert bool(jnp.all(jnp.isfinite(predict)))
    assert bool(jnp.all(jnp.isfinite(q)))
    # approx-reciprocal normalization -> generous tolerance on the row sums
    assert bool(jnp.allclose(jnp.sum(predict, axis=1), 1.0, atol=1e-2))
    assert bool(jnp.allclose(jnp.sum(q, axis=1), 1.0, atol=1e-2))

    print("KERNEL_OK")
</pallas_src>

<mosaic_0001>
module attributes {stable_mosaic.version = 11 : i64} {
  func.func @_hero_fused_kernel(%arg0: i32, %arg1: memref<8xi32, #tpu.memory_space<smem>>, %arg2: memref<8x16xf32, #tpu.memory_space<vmem>>, %arg3: memref<8x8xbf16, #tpu.memory_space<any>>, %arg4: memref<16x32xbf16, #tpu.memory_space<vmem>>, %arg5: memref<1x32xf32, #tpu.memory_space<vmem>>, %arg6: memref<32x32xbf16, #tpu.memory_space<vmem>>, %arg7: memref<1x32xf32, #tpu.memory_space<vmem>>, %arg8: memref<32x16xbf16, #tpu.memory_space<vmem>>, %arg9: memref<1x16xf32, #tpu.memory_space<vmem>>, %arg10: memref<16x8xbf16, #tpu.memory_space<vmem>>, %arg11: memref<1x8xf32, #tpu.memory_space<vmem>>, %arg12: memref<8x16xbf16, #tpu.memory_space<vmem>>, %arg13: memref<1x16xf32, #tpu.memory_space<vmem>>, %arg14: memref<16x32xbf16, #tpu.memory_space<vmem>>, %arg15: memref<1x32xf32, #tpu.memory_space<vmem>>, %arg16: memref<32x32xbf16, #tpu.memory_space<vmem>>, %arg17: memref<1x32xf32, #tpu.memory_space<vmem>>, %arg18: memref<32x16xbf16, #tpu.memory_space<vmem>>, %arg19: memref<1x16xf32, #tpu.memory_space<vmem>>, %arg20: memref<16x32xbf16, #tpu.memory_space<vmem>>, %arg21: memref<32x32xbf16, #tpu.memory_space<vmem>>, %arg22: memref<32x16xbf16, #tpu.memory_space<vmem>>, %arg23: memref<16x8xbf16, #tpu.memory_space<vmem>>, %arg24: memref<8x4xbf16, #tpu.memory_space<vmem>>, %arg25: memref<4x8xf32, #tpu.memory_space<vmem>>, %arg26: memref<8x128xf32, #tpu.memory_space<vmem>>, %arg27: memref<1x16xf32, #tpu.memory_space<vmem>>, %arg28: memref<8x8xbf16, #tpu.memory_space<vmem>>, %arg29: memref<!tpu.dma_semaphore, #tpu.memory_space<semaphore_mem>>) attributes {dimension_semantics = [#tpu.dimension_semantics<arbitrary>], iteration_bounds = array<i64: 1>, scalar_prefetch = 1 : i64, scratch_operands = 2 : i64, tpu.core_type = #tpu.core_type<tc>, window_params = [{pipeline_mode = #tpu.pipeline_mode<synchronous>, transform_indices = @transform_0, window_bounds = array<i64: 8, 16>}, {}, {pipeline_mode = #tpu.pipeline_mode<synchronous>, transform_indices = @transform_2, window_bounds = array<i64: 16, 32>}, {pipeline_mode = #tpu.pipeline_mode<synchronous>, transform_indices = @transform_3, window_bounds = array<i64: 1, 32>}, {pipeline_mode = #tpu.pipeline_mode<synchronous>, transform_indices = @transform_4, window_bounds = array<i64: 32, 32>}, {pipeline_mode = #tpu.pipeline_mode<synchronous>, transform_indices = @transform_5, window_bounds = array<i64: 1, 32>}, {pipeline_mode = #tpu.pipeline_mode<synchronous>, transform_indices = @transform_6, window_bounds = array<i64: 32, 16>}, {pipeline_mode = #tpu.pipeline_mode<synchronous>, transform_indices = @transform_7, window_bounds = array<i64: 1, 16>}, {pipeline_mode = #tpu.pipeline_mode<synchronous>, transform_indices = @transform_8, window_bounds = array<i64: 16, 8>}, {pipeline_mode = #tpu.pipeline_mode<synchronous>, transform_indices = @transform_9, window_bounds = array<i64: 1, 8>}, {pipeline_mode = #tpu.pipeline_mode<synchronous>, transform_indices = @transform_10, window_bounds = array<i64: 8, 16>}, {pipeline_mode = #tpu.pipeline_mode<synchronous>, transform_indices = @transform_11, window_bounds = array<i64: 1, 16>}, {pipeline_mode = #tpu.pipeline_mode<synchronous>, transform_indices = @transform_12, window_bounds = array<i64: 16, 32>}, {pipeline_mode = #tpu.pipeline_mode<synchronous>, transform_indices = @transform_13, window_bounds = array<i64: 1, 32>}, {pipeline_mode = #tpu.pipeline_mode<synchronous>, transform_indices = @transform_14, window_bounds = array<i64: 32, 32>}, {pipeline_mode = #tpu.pipeline_mode<synchronous>, transform_indices = @transform_15, window_bounds = array<i64: 1, 32>}, {pipeline_mode = #tpu.pipeline_mode<synchronous>, transform_indices = @transform_16, window_bounds = array<i64: 32, 16>}, {pipeline_mode = #tpu.pipeline_mode<synchronous>, transform_indices = @transform_17, window_bounds = array<i64: 1, 16>}, {pipeline_mode = #tpu.pipeline_mode<synchronous>, transform_indices = @transform_18, window_bounds = array<i64: 16, 32>}, {pipeline_mode = #tpu.pipeline_mode<synchronous>, transform_indices = @transform_19, window_bounds = array<i64: 32, 32>}, {pipeline_mode = #tpu.pipeline_mode<synchronous>, transform_indices = @transform_20, window_bounds = array<i64: 32, 16>}, {pipeline_mode = #tpu.pipeline_mode<synchronous>, transform_indices = @transform_21, window_bounds = array<i64: 16, 8>}, {pipeline_mode = #tpu.pipeline_mode<synchronous>, transform_indices = @transform_22, window_bounds = array<i64: 8, 4>}, {pipeline_mode = #tpu.pipeline_mode<synchronous>, transform_indices = @transform_23, window_bounds = array<i64: 4, 8>}, {pipeline_mode = #tpu.pipeline_mode<synchronous>, transform_indices = @transform_24, window_bounds = array<i64: 8, 128>}, {pipeline_mode = #tpu.pipeline_mode<synchronous>, transform_indices = @transform_25, window_bounds = array<i64: 1, 16>}]} {
    tpu.enqueue_dma source(%arg3 : memref<8x8xbf16, #tpu.memory_space<any>>) target(%arg28 : memref<8x8xbf16, #tpu.memory_space<vmem>>) target_semaphore(%arg29 : memref<!tpu.dma_semaphore, #tpu.memory_space<semaphore_mem>>)
    %c0 = arith.constant 0 : index
    %c0_0 = arith.constant 0 : index
    %0 = vector.load %arg2[%c0, %c0_0] : memref<8x16xf32, #tpu.memory_space<vmem>>, vector<8x16xf32>
    %c0_1 = arith.constant 0 : index
    %1 = memref.load %arg1[%c0_1] : memref<8xi32, #tpu.memory_space<smem>>
    %2 = arith.index_cast %1 : i32 to index
    %c0_2 = arith.constant 0 : index
    %3 = vector.load %arg2[%2, %c0_2] : memref<8x16xf32, #tpu.memory_space<vmem>>, vector<1x16xf32>
    %c1 = arith.constant 1 : index
    %4 = memref.load %arg1[%c1] : memref<8xi32, #tpu.memory_space<smem>>
    %5 = arith.index_cast %4 : i32 to index
    %c0_3 = arith.constant 0 : index
    %6 = vector.load %arg2[%5, %c0_3] : memref<8x16xf32, #tpu.memory_space<vmem>>, vector<1x16xf32>
    %c2 = arith.constant 2 : index
    %7 = memref.load %arg1[%c2] : memref<8xi32, #tpu.memory_space<smem>>
    %8 = arith.index_cast %7 : i32 to index
    %c0_4 = arith.constant 0 : index
    %9 = vector.load %arg2[%8, %c0_4] : memref<8x16xf32, #tpu.memory_space<vmem>>, vector<1x16xf32>
    %c3 = arith.constant 3 : index
    %10 = memref.load %arg1[%c3] : memref<8xi32, #tpu.memory_space<smem>>
    %11 = arith.index_cast %10 : i32 to index
    %c0_5 = arith.constant 0 : index
    %12 = vector.load %arg2[%11, %c0_5] : memref<8x16xf32, #tpu.memory_space<vmem>>, vector<1x16xf32>
    %c4 = arith.constant 4 : index
    %13 = memref.load %arg1[%c4] : memref<8xi32, #tpu.memory_space<smem>>
    %14 = arith.index_cast %13 : i32 to index
    %c0_6 = arith.constant 0 : index
    %15 = vector.load %arg2[%14, %c0_6] : memref<8x16xf32, #tpu.memory_space<vmem>>, vector<1x16xf32>
    %c5 = arith.constant 5 : index
    %16 = memref.load %arg1[%c5] : memref<8xi32, #tpu.memory_space<smem>>
    %17 = arith.index_cast %16 : i32 to index
    %c0_7 = arith.constant 0 : index
    %18 = vector.load %arg2[%17, %c0_7] : memref<8x16xf32, #tpu.memory_space<vmem>>, vector<1x16xf32>
    %c6 = arith.constant 6 : index
    %19 = memref.load %arg1[%c6] : memref<8xi32, #tpu.memory_space<smem>>
    %20 = arith.index_cast %19 : i32 to index
    %c0_8 = arith.constant 0 : index
    %21 = vector.load %arg2[%20, %c0_8] : memref<8x16xf32, #tpu.memory_space<vmem>>, vector<1x16xf32>
    %c7 = arith.constant 7 : index
    %22 = memref.load %arg1[%c7] : memref<8xi32, #tpu.memory_space<smem>>
    %23 = arith.index_cast %22 : i32 to index
    %c0_9 = arith.constant 0 : index
    %24 = vector.load %arg2[%23, %c0_9] : memref<8x16xf32, #tpu.memory_space<vmem>>, vector<1x16xf32>
    %25 = tpu.concatenate %0, %3, %6, %9, %12, %15, %18, %21, %24 in 0 : vector<8x16xf32>, vector<1x16xf32>, vector<1x16xf32>, vector<1x16xf32>, vector<1x16xf32>, vector<1x16xf32>, vector<1x16xf32>, vector<1x16xf32>, vector<1x16xf32> -> vector<16x16xf32>
    %26 = arith.truncf %25 : vector<16x16xf32> to vector<16x16xbf16>
    %c0_10 = arith.constant 0 : index
    %c0_11 = arith.constant 0 : index
    %27 = vector.load %arg4[%c0_10, %c0_11] : memref<16x32xbf16, #tpu.memory_space<vmem>>, vector<16x32xbf16>
    %cst = arith.constant dense<0.000000e+00> : vector<16x32xf32>
    %28 = tpu.matmul %26, %27, %cst {dimension_numbers = #tpu.dot_dimension_numbers<[1], [0], [0], [1], [0, 0, 1, 1], [], []>} : vector<16x16xbf16>, vector<16x32xbf16>, vector<16x32xf32> -> vector<16x32xf32>
    %c0_12 = arith.constant 0 : index
    %c0_13 = arith.constant 0 : index
    %29 = vector.load %arg5[%c0_12, %c0_13] : memref<1x32xf32, #tpu.memory_space<vmem>>, vector<1x32xf32>
    %30 = vector.broadcast %29 : vector<1x32xf32> to vector<16x32xf32>
    %31 = arith.addf %28, %30 : vector<16x32xf32>
    %cst_14 = arith.constant 0.000000e+00 : f32
    %32 = vector.broadcast %cst_14 : f32 to vector<16x32xf32>
    %33 = arith.maximumf %31, %32 : vector<16x32xf32>
    %34 = arith.truncf %33 : vector<16x32xf32> to vector<16x32xbf16>
    %c0_15 = arith.constant 0 : index
    %c0_16 = arith.constant 0 : index
    %35 = vector.load %arg6[%c0_15, %c0_16] : memref<32x32xbf16, #tpu.memory_space<vmem>>, vector<32x32xbf16>
    %cst_17 = arith.constant dense<0.000000e+00> : vector<16x32xf32>
    %36 = tpu.matmul %34, %35, %cst_17 {dimension_numbers = #tpu.dot_dimension_numbers<[1], [0], [0], [1], [0, 0, 1, 1], [], []>} : vector<16x32xbf16>, vector<32x32xbf16>, vector<16x32xf32> -> vector<16x32xf32>
    %c0_18 = arith.constant 0 : index
    %c0_19 = arith.constant 0 : index
    %37 = vector.load %arg7[%c0_18, %c0_19] : memref<1x32xf32, #tpu.memory_space<vmem>>, vector<1x32xf32>
    %38 = vector.broadcast %37 : vector<1x32xf32> to vector<16x32xf32>
    %39 = arith.addf %36, %38 : vector<16x32xf32>
    %cst_20 = arith.constant 0.000000e+00 : f32
    %40 = vector.broadcast %cst_20 : f32 to vector<16x32xf32>
    %41 = arith.maximumf %39, %40 : vector<16x32xf32>
    %42 = arith.truncf %41 : vector<16x32xf32> to vector<16x32xbf16>
    %c0_21 = arith.constant 0 : index
    %c0_22 = arith.constant 0 : index
    %43 = vector.load %arg8[%c0_21, %c0_22] : memref<32x16xbf16, #tpu.memory_space<vmem>>, vector<32x16xbf16>
    %cst_23 = arith.constant dense<0.000000e+00> : vector<16x16xf32>
    %44 = tpu.matmul %42, %43, %cst_23 {dimension_numbers = #tpu.dot_dimension_numbers<[1], [0], [0], [1], [0, 0, 1, 1], [], []>} : vector<16x32xbf16>, vector<32x16xbf16>, vector<16x16xf32> -> vector<16x16xf32>
    %c0_24 = arith.constant 0 : index
    %c0_25 = arith.constant 0 : index
    %45 = vector.load %arg9[%c0_24, %c0_25] : memref<1x16xf32, #tpu.memory_space<vmem>>, vector<1x16xf32>
    %46 = vector.broadcast %45 : vector<1x16xf32> to vector<16x16xf32>
    %47 = arith.addf %44, %46 : vector<16x16xf32>
    %cst_26 = arith.constant 0.000000e+00 : f32
    %48 = vector.broadcast %cst_26 : f32 to vector<16x16xf32>
    %49 = arith.maximumf %47, %48 : vector<16x16xf32>
    %50 = vector.extract_strided_slice %33 {offsets = [0, 0], sizes = [8, 32], strides = [1, 1]} : vector<16x32xf32> to vector<8x32xf32>
    %51 = vector.extract_strided_slice %33 {offsets = [8, 0], sizes = [8, 32], strides = [1, 1]} : vector<16x32xf32> to vector<8x32xf32>
    %52 = vector.extract_strided_slice %41 {offsets = [0, 0], sizes = [8, 32], strides = [1, 1]} : vector<16x32xf32> to vector<8x32xf32>
    %53 = vector.extract_strided_slice %41 {offsets = [8, 0], sizes = [8, 32], strides = [1, 1]} : vector<16x32xf32> to vector<8x32xf32>
    %54 = vector.extract_strided_slice %49 {offsets = [0, 0], sizes = [8, 16], strides = [1, 1]} : vector<16x16xf32> to vector<8x16xf32>
    %55 = vector.extract_strided_slice %49 {offsets = [8, 0], sizes = [8, 16], strides = [1, 1]} : vector<16x16xf32> to vector<8x16xf32>
    %56 = arith.truncf %54 : vector<8x16xf32> to vector<8x16xbf16>
    %c0_27 = arith.constant 0 : index
    %c0_28 = arith.constant 0 : index
    %57 = vector.load %arg10[%c0_27, %c0_28] : memref<16x8xbf16, #tpu.memory_space<vmem>>, vector<16x8xbf16>
    %cst_29 = arith.constant dense<0.000000e+00> : vector<8x8xf32>
    %58 = tpu.matmul %56, %57, %cst_29 {dimension_numbers = #tpu.dot_dimension_numbers<[1], [0], [0], [1], [0, 0, 1, 1], [], []>} : vector<8x16xbf16>, vector<16x8xbf16>, vector<8x8xf32> -> vector<8x8xf32>
    %c0_30 = arith.constant 0 : index
    %c0_31 = arith.constant 0 : index
    %59 = vector.load %arg11[%c0_30, %c0_31] : memref<1x8xf32, #tpu.memory_space<vmem>>, vector<1x8xf32>
    %60 = vector.broadcast %59 : vector<1x8xf32> to vector<8x8xf32>
    %61 = arith.addf %58, %60 : vector<8x8xf32>
    %62 = arith.truncf %61 : vector<8x8xf32> to vector<8x8xbf16>
    %c0_32 = arith.constant 0 : index
    %c0_33 = arith.constant 0 : index
    %63 = vector.load %arg12[%c0_32, %c0_33] : memref<8x16xbf16, #tpu.memory_space<vmem>>, vector<8x16xbf16>
    %cst_34 = arith.constant dense<0.000000e+00> : vector<8x16xf32>
    %64 = tpu.matmul %62, %63, %cst_34 {dimension_numbers = #tpu.dot_dimension_numbers<[1], [0], [0], [1], [0, 0, 1, 1], [], []>} : vector<8x8xbf16>, vector<8x16xbf16>, vector<8x16xf32> -> vector<8x16xf32>
    %c0_35 = arith.constant 0 : index
    %c0_36 = arith.constant 0 : index
    %65 = vector.load %arg13[%c0_35, %c0_36] : memref<1x16xf32, #tpu.memory_space<vmem>>, vector<1x16xf32>
    %66 = vector.broadcast %65 : vector<1x16xf32> to vector<8x16xf32>
    %67 = arith.addf %64, %66 : vector<8x16xf32>
    %cst_37 = arith.constant 0.000000e+00 : f32
    %68 = vector.broadcast %cst_37 : f32 to vector<8x16xf32>
    %69 = arith.maximumf %67, %68 : vector<8x16xf32>
    %70 = arith.truncf %69 : vector<8x16xf32> to vector<8x16xbf16>
    %c0_38 = arith.constant 0 : index
    %c0_39 = arith.constant 0 : index
    %71 = vector.load %arg14[%c0_38, %c0_39] : memref<16x32xbf16, #tpu.memory_space<vmem>>, vector<16x32xbf16>
    %cst_40 = arith.constant dense<0.000000e+00> : vector<8x32xf32>
    %72 = tpu.matmul %70, %71, %cst_40 {dimension_numbers = #tpu.dot_dimension_numbers<[1], [0], [0], [1], [0, 0, 1, 1], [], []>} : vector<8x16xbf16>, vector<16x32xbf16>, vector<8x32xf32> -> vector<8x32xf32>
    %c0_41 = arith.constant 0 : index
    %c0_42 = arith.constant 0 : index
    %73 = vector.load %arg15[%c0_41, %c0_42] : memref<1x32xf32, #tpu.memory_space<vmem>>, vector<1x32xf32>
    %74 = vector.broadcast %73 : vector<1x32xf32> to vector<8x32xf32>
    %75 = arith.addf %72, %74 : vector<8x32xf32>
    %cst_43 = arith.constant 0.000000e+00 : f32
    %76 = vector.broadcast %cst_43 : f32 to vector<8x32xf32>
    %77 = arith.maximumf %75, %76 : vector<8x32xf32>
    %78 = arith.truncf %77 : vector<8x32xf32> to vector<8x32xbf16>
    %c0_44 = arith.constant 0 : index
    %c0_45 = arith.constant 0 : index
    %79 = vector.load %arg16[%c0_44, %c0_45] : memref<32x32xbf16, #tpu.memory_space<vmem>>, vector<32x32xbf16>
    %cst_46 = arith.constant dense<0.000000e+00> : vector<8x32xf32>
    %80 = tpu.matmul %78, %79, %cst_46 {dimension_numbers = #tpu.dot_dimension_numbers<[1], [0], [0], [1], [0, 0, 1, 1], [], []>} : vector<8x32xbf16>, vector<32x32xbf16>, vector<8x32xf32> -> vector<8x32xf32>
    %c0_47 = arith.constant 0 : index
    %c0_48 = arith.constant 0 : index
    %81 = vector.load %arg17[%c0_47, %c0_48] : memref<1x32xf32, #tpu.memory_space<vmem>>, vector<1x32xf32>
    %82 = vector.broadcast %81 : vector<1x32xf32> to vector<8x32xf32>
    %83 = arith.addf %80, %82 : vector<8x32xf32>
    %cst_49 = arith.constant 0.000000e+00 : f32
    %84 = vector.broadcast %cst_49 : f32 to vector<8x32xf32>
    %85 = arith.maximumf %83, %84 : vector<8x32xf32>
    %86 = arith.truncf %85 : vector<8x32xf32> to vector<8x32xbf16>
    %c0_50 = arith.constant 0 : index
    %c0_51 = arith.constant 0 : index
    %87 = vector.load %arg18[%c0_50, %c0_51] : memref<32x16xbf16, #tpu.memory_space<vmem>>, vector<32x16xbf16>
    %cst_52 = arith.constant dense<0.000000e+00> : vector<8x16xf32>
    %88 = tpu.matmul %86, %87, %cst_52 {dimension_numbers = #tpu.dot_dimension_numbers<[1], [0], [0], [1], [0, 0, 1, 1], [], []>} : vector<8x32xbf16>, vector<32x16xbf16>, vector<8x16xf32> -> vector<8x16xf32>
    %c0_53 = arith.constant 0 : index
    %c0_54 = arith.constant 0 : index
    %89 = vector.load %arg19[%c0_53, %c0_54] : memref<1x16xf32, #tpu.memory_space<vmem>>, vector<1x16xf32>
    %90 = vector.broadcast %89 : vector<1x16xf32> to vector<8x16xf32>
    %91 = arith.addf %88, %90 : vector<8x16xf32>
    tpu.wait_dma2 semaphore(%arg29 : memref<!tpu.dma_semaphore, #tpu.memory_space<semaphore_mem>>) src(%arg3 : memref<8x8xbf16, #tpu.memory_space<any>>) dst(%arg28 : memref<8x8xbf16, #tpu.memory_space<vmem>>)
    %c0_55 = arith.constant 0 : index
    %c0_56 = arith.constant 0 : index
    %92 = vector.load %arg28[%c0_55, %c0_56] : memref<8x8xbf16, #tpu.memory_space<vmem>>, vector<8x8xbf16>
    %93 = arith.truncf %0 : vector<8x16xf32> to vector<8x16xbf16>
    %c0_57 = arith.constant 0 : index
    %c0_58 = arith.constant 0 : index
    %94 = vector.load %arg20[%c0_57, %c0_58] : memref<16x32xbf16, #tpu.memory_space<vmem>>, vector<16x32xbf16>
    %cst_59 = arith.constant dense<0.000000e+00> : vector<8x32xf32>
    %95 = tpu.matmul %93, %94, %cst_59 {dimension_numbers = #tpu.dot_dimension_numbers<[1], [0], [0], [1], [0, 0, 1, 1], [], []>} : vector<8x16xbf16>, vector<16x32xbf16>, vector<8x32xf32> -> vector<8x32xf32>
    %96 = arith.truncf %95 : vector<8x32xf32> to vector<8x32xbf16>
    %cst_60 = arith.constant dense<0.000000e+00> : vector<8x32xf32>
    %97 = tpu.matmul %92, %96, %cst_60 {dimension_numbers = #tpu.dot_dimension_numbers<[1], [0], [0], [1], [0, 0, 1, 1], [], []>} : vector<8x8xbf16>, vector<8x32xbf16>, vector<8x32xf32> -> vector<8x32xf32>
    %cst_61 = arith.constant 0.000000e+00 : f32
    %98 = vector.broadcast %cst_61 : f32 to vector<8x32xf32>
    %99 = arith.maximumf %97, %98 : vector<8x32xf32>
    %cst_62 = arith.constant 5.000000e-01 : f32
    %100 = vector.broadcast %cst_62 : f32 to vector<8x32xf32>
    %101 = arith.mulf %100, %99 : vector<8x32xf32>
    %cst_63 = arith.constant 5.000000e-01 : f32
    %102 = vector.broadcast %cst_63 : f32 to vector<8x32xf32>
    %103 = arith.mulf %102, %50 : vector<8x32xf32>
    %104 = arith.addf %101, %103 : vector<8x32xf32>
    %cst_64 = arith.constant 5.000000e-01 : f32
    %105 = vector.broadcast %cst_64 : f32 to vector<8x32xf32>
    %106 = arith.mulf %105, %99 : vector<8x32xf32>
    %cst_65 = arith.constant 5.000000e-01 : f32
    %107 = vector.broadcast %cst_65 : f32 to vector<8x32xf32>
    %108 = arith.mulf %107, %51 : vector<8x32xf32>
    %109 = arith.addf %106, %108 : vector<8x32xf32>
    %110 = tpu.concatenate %104, %109 in 0 : vector<8x32xf32>, vector<8x32xf32> -> vector<16x32xf32>
    %111 = arith.truncf %110 : vector<16x32xf32> to vector<16x32xbf16>
    %c0_66 = arith.constant 0 : index
    %c0_67 = arith.constant 0 : index
    %112 = vector.load %arg21[%c0_66, %c0_67] : memref<32x32xbf16, #tpu.memory_space<vmem>>, vector<32x32xbf16>
    %cst_68 = arith.constant dense<0.000000e+00> : vector<16x32xf32>
    %113 = tpu.matmul %111, %112, %cst_68 {dimension_numbers = #tpu.dot_dimension_numbers<[1], [0], [0], [1], [0, 0, 1, 1], [], []>} : vector<16x32xbf16>, vector<32x32xbf16>, vector<16x32xf32> -> vector<16x32xf32>
    %114 = vector.extract_strided_slice %113 {offsets = [0, 0], sizes = [8, 32], strides = [1, 1]} : vector<16x32xf32> to vector<8x32xf32>
    %115 = vector.extract_strided_slice %113 {offsets = [8, 0], sizes = [8, 32], strides = [1, 1]} : vector<16x32xf32> to vector<8x32xf32>
    %116 = tpu.concatenate %114, %115 in 1 : vector<8x32xf32>, vector<8x32xf32> -> vector<8x64xf32>
    %117 = arith.truncf %116 : vector<8x64xf32> to vector<8x64xbf16>
    %cst_69 = arith.constant dense<0.000000e+00> : vector<8x64xf32>
    %118 = tpu.matmul %92, %117, %cst_69 {dimension_numbers = #tpu.dot_dimension_numbers<[1], [0], [0], [1], [0, 0, 1, 1], [], []>} : vector<8x8xbf16>, vector<8x64xbf16>, vector<8x64xf32> -> vector<8x64xf32>
    %cst_70 = arith.constant 0.000000e+00 : f32
    %119 = vector.broadcast %cst_70 : f32 to vector<8x64xf32>
    %120 = arith.maximumf %118, %119 : vector<8x64xf32>
    %121 = vector.extract_strided_slice %120 {offsets = [0, 0], sizes = [8, 32], strides = [1, 1]} : vector<8x64xf32> to vector<8x32xf32>
    %122 = vector.extract_strided_slice %120 {offsets = [0, 32], sizes = [8, 32], strides = [1, 1]} : vector<8x64xf32> to vector<8x32xf32>
    %cst_71 = arith.constant 5.000000e-01 : f32
    %123 = vector.broadcast %cst_71 : f32 to vector<8x32xf32>
    %124 = arith.mulf %123, %121 : vector<8x32xf32>
    %cst_72 = arith.constant 5.000000e-01 : f32
    %125 = vector.broadcast %cst_72 : f32 to vector<8x32xf32>
    %126 = arith.mulf %125, %52 : vector<8x32xf32>
    %127 = arith.addf %124, %126 : vector<8x32xf32>
    %cst_73 = arith.constant 5.000000e-01 : f32
    %128 = vector.broadcast %cst_73 : f32 to vector<8x32xf32>
    %129 = arith.mulf %128, %122 : vector<8x32xf32>
    %cst_74 = arith.constant 5.000000e-01 : f32
    %130 = vector.broadcast %cst_74 : f32 to vector<8x32xf32>
    %131 = arith.mulf %130, %53 : vector<8x32xf32>
    %132 = arith.addf %129, %131 : vector<8x32xf32>
    %133 = tpu.concatenate %127, %132 in 0 : vector<8x32xf32>, vector<8x32xf32> -> vector<16x32xf32>
    %134 = arith.truncf %133 : vector<16x32xf32> to vector<16x32xbf16>
    %c0_75 = arith.constant 0 : index
    %c0_76 = arith.constant 0 : index
    %135 = vector.load %arg22[%c0_75, %c0_76] : memref<32x16xbf16, #tpu.memory_space<vmem>>, vector<32x16xbf16>
    %cst_77 = arith.constant dense<0.000000e+00> : vector<16x16xf32>
    %136 = tpu.matmul %134, %135, %cst_77 {dimension_numbers = #tpu.dot_dimension_numbers<[1], [0], [0], [1], [0, 0, 1, 1], [], []>} : vector<16x32xbf16>, vector<32x16xbf16>, vector<16x16xf32> -> vector<16x16xf32>
    %137 = vector.extract_strided_slice %136 {offsets = [0, 0], sizes = [8, 16], strides = [1, 1]} : vector<16x16xf32> to vector<8x16xf32>
    %138 = vector.extract_strided_slice %136 {offsets = [8, 0], sizes = [8, 16], strides = [1, 1]} : vector<16x16xf32> to vector<8x16xf32>
    %139 = tpu.concatenate %137, %138 in 1 : vector<8x16xf32>, vector<8x16xf32> -> vector<8x32xf32>
    %140 = arith.truncf %139 : vector<8x32xf32> to vector<8x32xbf16>
    %cst_78 = arith.constant dense<0.000000e+00> : vector<8x32xf32>
    %141 = tpu.matmul %92, %140, %cst_78 {dimension_numbers = #tpu.dot_dimension_numbers<[1], [0], [0], [1], [0, 0, 1, 1], [], []>} : vector<8x8xbf16>, vector<8x32xbf16>, vector<8x32xf32> -> vector<8x32xf32>
    %cst_79 = arith.constant 0.000000e+00 : f32
    %142 = vector.broadcast %cst_79 : f32 to vector<8x32xf32>
    %143 = arith.maximumf %141, %142 : vector<8x32xf32>
    %144 = vector.extract_strided_slice %143 {offsets = [0, 0], sizes = [8, 16], strides = [1, 1]} : vector<8x32xf32> to vector<8x16xf32>
    %145 = vector.extract_strided_slice %143 {offsets = [0, 16], sizes = [8, 16], strides = [1, 1]} : vector<8x32xf32> to vector<8x16xf32>
    %cst_80 = arith.constant 5.000000e-01 : f32
    %146 = vector.broadcast %cst_80 : f32 to vector<8x16xf32>
    %147 = arith.mulf %146, %144 : vector<8x16xf32>
    %cst_81 = arith.constant 5.000000e-01 : f32
    %148 = vector.broadcast %cst_81 : f32 to vector<8x16xf32>
    %149 = arith.mulf %148, %54 : vector<8x16xf32>
    %150 = arith.addf %147, %149 : vector<8x16xf32>
    %cst_82 = arith.constant 5.000000e-01 : f32
    %151 = vector.broadcast %cst_82 : f32 to vector<8x16xf32>
    %152 = arith.mulf %151, %145 : vector<8x16xf32>
    %cst_83 = arith.constant 5.000000e-01 : f32
    %153 = vector.broadcast %cst_83 : f32 to vector<8x16xf32>
    %154 = arith.mulf %153, %55 : vector<8x16xf32>
    %155 = arith.addf %152, %154 : vector<8x16xf32>
    %156 = arith.truncf %150 : vector<8x16xf32> to vector<8x16xbf16>
    %c0_84 = arith.constant 0 : index
    %c0_85 = arith.constant 0 : index
    %157 = vector.load %arg23[%c0_84, %c0_85] : memref<16x8xbf16, #tpu.memory_space<vmem>>, vector<16x8xbf16>
    %cst_86 = arith.constant dense<0.000000e+00> : vector<8x8xf32>
    %158 = tpu.matmul %156, %157, %cst_86 {dimension_numbers = #tpu.dot_dimension_numbers<[1], [0], [0], [1], [0, 0, 1, 1], [], []>} : vector<8x16xbf16>, vector<16x8xbf16>, vector<8x8xf32> -> vector<8x8xf32>
    %159 = arith.truncf %158 : vector<8x8xf32> to vector<8x8xbf16>
    %cst_87 = arith.constant dense<0.000000e+00> : vector<8x8xf32>
    %160 = tpu.matmul %92, %159, %cst_87 {dimension_numbers = #tpu.dot_dimension_numbers<[1], [0], [0], [1], [0, 0, 1, 1], [], []>} : vector<8x8xbf16>, vector<8x8xbf16>, vector<8x8xf32> -> vector<8x8xf32>
    %cst_88 = arith.constant 0.000000e+00 : f32
    %161 = vector.broadcast %cst_88 : f32 to vector<8x8xf32>
    %162 = arith.maximumf %160, %161 : vector<8x8xf32>
    %cst_89 = arith.constant 5.000000e-01 : f32
    %163 = vector.broadcast %cst_89 : f32 to vector<8x8xf32>
    %164 = arith.mulf %163, %162 : vector<8x8xf32>
    %cst_90 = arith.constant 5.000000e-01 : f32
    %165 = vector.broadcast %cst_90 : f32 to vector<8x8xf32>
    %166 = arith.mulf %165, %61 : vector<8x8xf32>
    %167 = arith.addf %164, %166 : vector<8x8xf32>
    %168 = arith.truncf %167 : vector<8x8xf32> to vector<8x8xbf16>
    %c0_91 = arith.constant 0 : index
    %c0_92 = arith.constant 0 : index
    %169 = vector.load %arg24[%c0_91, %c0_92] : memref<8x4xbf16, #tpu.memory_space<vmem>>, vector<8x4xbf16>
    %cst_93 = arith.constant dense<0.000000e+00> : vector<8x4xf32>
    %170 = tpu.matmul %168, %169, %cst_93 {dimension_numbers = #tpu.dot_dimension_numbers<[1], [0], [0], [1], [0, 0, 1, 1], [], []>} : vector<8x8xbf16>, vector<8x4xbf16>, vector<8x4xf32> -> vector<8x4xf32>
    %171 = arith.truncf %170 : vector<8x4xf32> to vector<8x4xbf16>
    %cst_94 = arith.constant dense<0.000000e+00> : vector<8x4xf32>
    %172 = tpu.matmul %92, %171, %cst_94 {dimension_numbers = #tpu.dot_dimension_numbers<[1], [0], [0], [1], [0, 0, 1, 1], [], []>} : vector<8x8xbf16>, vector<8x4xbf16>, vector<8x4xf32> -> vector<8x4xf32>
    %cst_95 = arith.constant dense<0xFF800000> : vector<8xf32>
    %173 = vector.multi_reduction <maximumf>, %172, %cst_95 [1] : vector<8x4xf32> to vector<8xf32>
    %174 = vector.shape_cast %173 : vector<8xf32> to vector<8x1xf32>
    %175 = vector.broadcast %174 : vector<8x1xf32> to vector<8x4xf32>
    %176 = arith.subf %172, %175 : vector<8x4xf32>
    %177 = math.exp %176 : vector<8x4xf32>
    %cst_96 = arith.constant dense<0.000000e+00> : vector<8xf32>
    %178 = vector.multi_reduction <add>, %177, %cst_96 [1] : vector<8x4xf32> to vector<8xf32>
    %179 = vector.shape_cast %178 : vector<8xf32> to vector<8x1xf32>
    %180 = tpu.reciprocal %179 {approx = true} : vector<8x1xf32> -> vector<8x1xf32>
    %181 = vector.broadcast %180 : vector<8x1xf32> to vector<8x4xf32>
    %182 = arith.mulf %177, %181 : vector<8x4xf32>
    %cst_97 = arith.constant dense<0.000000e+00> : vector<16xf32>
    %183 = vector.multi_reduction <add>, %150, %cst_97 [0] : vector<8x16xf32> to vector<16xf32>
    %184 = vector.shape_cast %183 : vector<16xf32> to vector<1x16xf32>
    %cst_98 = arith.constant 8.000000e+00 : f32
    %185 = vector.broadcast %cst_98 : f32 to vector<1x16xf32>
    %186 = arith.divf %184, %185 : vector<1x16xf32>
    %187 = math.absf %186 : vector<1x16xf32>
    %cst_99 = arith.constant 0.000000e+00 : f32
    %188 = vector.broadcast %cst_99 : f32 to vector<1x16xf32>
    %189 = arith.subf %188, %187 : vector<1x16xf32>
    %190 = math.exp %189 : vector<1x16xf32>
    %cst_100 = arith.constant 1.000000e+00 : f32
    %191 = vector.broadcast %cst_100 : f32 to vector<1x16xf32>
    %192 = arith.addf %191, %190 : vector<1x16xf32>
    %193 = tpu.reciprocal %192 {approx = true} : vector<1x16xf32> -> vector<1x16xf32>
    %cst_101 = arith.constant 0.000000e+00 : f32
    %194 = vector.broadcast %cst_101 : f32 to vector<1x16xf32>
    %195 = arith.cmpf oge, %186, %194 : vector<1x16xf32>
    %196 = arith.mulf %190, %193 : vector<1x16xf32>
    %197 = arith.select %195, %193, %196 : vector<1x16xi1>, vector<1x16xf32>
    %c0_102 = arith.constant 0 : index
    %c0_103 = arith.constant 0 : index
    %198 = vector.load %arg25[%c0_102, %c0_103] : memref<4x8xf32, #tpu.memory_space<vmem>>, vector<4x8xf32>
    %199 = arith.mulf %61, %61 : vector<8x8xf32>
    %cst_104 = arith.constant dense<0.000000e+00> : vector<8xf32>
    %200 = vector.multi_reduction <add>, %199, %cst_104 [1] : vector<8x8xf32> to vector<8xf32>
    %201 = vector.shape_cast %200 : vector<8xf32> to vector<8x1xf32>
    %202 = arith.mulf %198, %198 : vector<4x8xf32>
    %cst_105 = arith.constant dense<0.000000e+00> : vector<4xf32>
    %203 = vector.multi_reduction <add>, %202, %cst_105 [1] : vector<4x8xf32> to vector<4xf32>
    %204 = vector.shape_cast %203 : vector<4xf32> to vector<4x1xf32>
    %205 = tpu.transpose %204, [1, 0] : vector<4x1xf32> -> vector<1x4xf32>
    %206 = tpu.transpose %198, [1, 0] : vector<4x8xf32> -> vector<8x4xf32>
    %cst_106 = arith.constant dense<0.000000e+00> : vector<8x4xf32>
    %207 = tpu.matmul %61, %206, %cst_106 {dimension_numbers = #tpu.dot_dimension_numbers<[1], [0], [0], [1], [0, 0, 1, 1], [], []>} : vector<8x8xf32>, vector<8x4xf32>, vector<8x4xf32> -> vector<8x4xf32>
    %208 = vector.broadcast %201 : vector<8x1xf32> to vector<8x4xf32>
    %209 = vector.broadcast %205 : vector<1x4xf32> to vector<8x4xf32>
    %210 = arith.addf %208, %209 : vector<8x4xf32>
    %cst_107 = arith.constant 2.000000e+00 : f32
    %211 = vector.broadcast %cst_107 : f32 to vector<8x4xf32>
    %212 = arith.mulf %211, %207 : vector<8x4xf32>
    %213 = arith.subf %210, %212 : vector<8x4xf32>
    %cst_108 = arith.constant 0.000000e+00 : f32
    %214 = vector.broadcast %cst_108 : f32 to vector<8x4xf32>
    %215 = arith.maximumf %213, %214 : vector<8x4xf32>
    %cst_109 = arith.constant 1.000000e+00 : f32
    %216 = vector.broadcast %cst_109 : f32 to vector<8x4xf32>
    %217 = arith.mulf %215, %216 : vector<8x4xf32>
    %cst_110 = arith.constant 1.000000e+00 : f32
    %218 = vector.broadcast %cst_110 : f32 to vector<8x4xf32>
    %219 = arith.addf %218, %217 : vector<8x4xf32>
    %220 = tpu.reciprocal %219 {approx = true} : vector<8x4xf32> -> vector<8x4xf32>
    %cst_111 = arith.constant dense<0.000000e+00> : vector<8xf32>
    %221 = vector.multi_reduction <add>, %220, %cst_111 [1] : vector<8x4xf32> to vector<8xf32>
    %222 = vector.shape_cast %221 : vector<8xf32> to vector<8x1xf32>
    %223 = tpu.reciprocal %222 {approx = true} : vector<8x1xf32> -> vector<8x1xf32>
    %224 = vector.broadcast %223 : vector<8x1xf32> to vector<8x4xf32>
    %225 = arith.mulf %220, %224 : vector<8x4xf32>
    %cst_112 = arith.constant 0.000000e+00 : f32
    %226 = vector.broadcast %cst_112 : f32 to vector<8x60xf32>
    %227 = tpu.concatenate %172, %182, %225, %61, %150, %155, %91, %226 in 1 : vector<8x4xf32>, vector<8x4xf32>, vector<8x4xf32>, vector<8x8xf32>, vector<8x16xf32>, vector<8x16xf32>, vector<8x16xf32>, vector<8x60xf32> -> vector<8x128xf32>
    %c0_113 = arith.constant 0 : index
    %c0_114 = arith.constant 0 : index
    %228 = vector.load %arg26[%c0_113, %c0_114] : memref<8x128xf32, #tpu.memory_space<vmem>>, vector<8x128xf32>
    tpu.vector_store %arg26[%c0_113, %c0_114], %227 {strides = array<i32>} : memref<8x128xf32, #tpu.memory_space<vmem>>, vector<8x128xf32>,
    %c0_115 = arith.constant 0 : index
    %c0_116 = arith.constant 0 : index
    %229 = vector.load %arg27[%c0_115, %c0_116] : memref<1x16xf32, #tpu.memory_space<vmem>>, vector<1x16xf32>
    tpu.vector_store %arg27[%c0_115, %c0_116], %197 {strides = array<i32>} : memref<1x16xf32, #tpu.memory_space<vmem>>, vector<1x16xf32>,
    return
  }
  func.func @transform_0(%arg0: i32, %arg1: memref<8xi32, #tpu.memory_space<smem>>) -> (i32, i32) {
    %c0_i32 = arith.constant 0 : i32
    %c0_i32_0 = arith.constant 0 : i32
    %c0_i32_1 = arith.constant 0 : i32
    return %c0_i32, %c0_i32_0 : i32, i32
  }
  func.func @transform_2(%arg0: i32, %arg1: memref<8xi32, #tpu.memory_space<smem>>) -> (i32, i32) {
    %c0_i32 = arith.constant 0 : i32
    %c0_i32_0 = arith.constant 0 : i32
    %c0_i32_1 = arith.constant 0 : i32
    return %c0_i32, %c0_i32_0 : i32, i32
  }
  func.func @transform_3(%arg0: i32, %arg1: memref<8xi32, #tpu.memory_space<smem>>) -> (i32, i32) {
    %c0_i32 = arith.constant 0 : i32
    %c0_i32_0 = arith.constant 0 : i32
    %c0_i32_1 = arith.constant 0 : i32
    return %c0_i32, %c0_i32_0 : i32, i32
  }
  func.func @transform_4(%arg0: i32, %arg1: memref<8xi32, #tpu.memory_space<smem>>) -> (i32, i32) {
    %c0_i32 = arith.constant 0 : i32
    %c0_i32_0 = arith.constant 0 : i32
    %c0_i32_1 = arith.constant 0 : i32
    return %c0_i32, %c0_i32_0 : i32, i32
  }
  func.func @transform_5(%arg0: i32, %arg1: memref<8xi32, #tpu.memory_space<smem>>) -> (i32, i32) {
    %c0_i32 = arith.constant 0 : i32
    %c0_i32_0 = arith.constant 0 : i32
    %c0_i32_1 = arith.constant 0 : i32
    return %c0_i32, %c0_i32_0 : i32, i32
  }
  func.func @transform_6(%arg0: i32, %arg1: memref<8xi32, #tpu.memory_space<smem>>) -> (i32, i32) {
    %c0_i32 = arith.constant 0 : i32
    %c0_i32_0 = arith.constant 0 : i32
    %c0_i32_1 = arith.constant 0 : i32
    return %c0_i32, %c0_i32_0 : i32, i32
  }
  func.func @transform_7(%arg0: i32, %arg1: memref<8xi32, #tpu.memory_space<smem>>) -> (i32, i32) {
    %c0_i32 = arith.constant 0 : i32
    %c0_i32_0 = arith.constant 0 : i32
    %c0_i32_1 = arith.constant 0 : i32
    return %c0_i32, %c0_i32_0 : i32, i32
  }
  func.func @transform_8(%arg0: i32, %arg1: memref<8xi32, #tpu.memory_space<smem>>) -> (i32, i32) {
    %c0_i32 = arith.constant 0 : i32
    %c0_i32_0 = arith.constant 0 : i32
    %c0_i32_1 = arith.constant 0 : i32
    return %c0_i32, %c0_i32_0 : i32, i32
  }
  func.func @transform_9(%arg0: i32, %arg1: memref<8xi32, #tpu.memory_space<smem>>) -> (i32, i32) {
    %c0_i32 = arith.constant 0 : i32
    %c0_i32_0 = arith.constant 0 : i32
    %c0_i32_1 = arith.constant 0 : i32
    return %c0_i32, %c0_i32_0 : i32, i32
  }
  func.func @transform_10(%arg0: i32, %arg1: memref<8xi32, #tpu.memory_space<smem>>) -> (i32, i32) {
    %c0_i32 = arith.constant 0 : i32
    %c0_i32_0 = arith.constant 0 : i32
    %c0_i32_1 = arith.constant 0 : i32
    return %c0_i32, %c0_i32_0 : i32, i32
  }
  func.func @transform_11(%arg0: i32, %arg1: memref<8xi32, #tpu.memory_space<smem>>) -> (i32, i32) {
    %c0_i32 = arith.constant 0 : i32
    %c0_i32_0 = arith.constant 0 : i32
    %c0_i32_1 = arith.constant 0 : i32
    return %c0_i32, %c0_i32_0 : i32, i32
  }
  func.func @transform_12(%arg0: i32, %arg1: memref<8xi32, #tpu.memory_space<smem>>) -> (i32, i32) {
    %c0_i32 = arith.constant 0 : i32
    %c0_i32_0 = arith.constant 0 : i32
    %c0_i32_1 = arith.constant 0 : i32
    return %c0_i32, %c0_i32_0 : i32, i32
  }
  func.func @transform_13(%arg0: i32, %arg1: memref<8xi32, #tpu.memory_space<smem>>) -> (i32, i32) {
    %c0_i32 = arith.constant 0 : i32
    %c0_i32_0 = arith.constant 0 : i32
    %c0_i32_1 = arith.constant 0 : i32
    return %c0_i32, %c0_i32_0 : i32, i32
  }
  func.func @transform_14(%arg0: i32, %arg1: memref<8xi32, #tpu.memory_space<smem>>) -> (i32, i32) {
    %c0_i32 = arith.constant 0 : i32
    %c0_i32_0 = arith.constant 0 : i32
    %c0_i32_1 = arith.constant 0 : i32
    return %c0_i32, %c0_i32_0 : i32, i32
  }
  func.func @transform_15(%arg0: i32, %arg1: memref<8xi32, #tpu.memory_space<smem>>) -> (i32, i32) {
    %c0_i32 = arith.constant 0 : i32
    %c0_i32_0 = arith.constant 0 : i32
    %c0_i32_1 = arith.constant 0 : i32
    return %c0_i32, %c0_i32_0 : i32, i32
  }
  func.func @transform_16(%arg0: i32, %arg1: memref<8xi32, #tpu.memory_space<smem>>) -> (i32, i32) {
    %c0_i32 = arith.constant 0 : i32
    %c0_i32_0 = arith.constant 0 : i32
    %c0_i32_1 = arith.constant 0 : i32
    return %c0_i32, %c0_i32_0 : i32, i32
  }
  func.func @transform_17(%arg0: i32, %arg1: memref<8xi32, #tpu.memory_space<smem>>) -> (i32, i32) {
    %c0_i32 = arith.constant 0 : i32
    %c0_i32_0 = arith.constant 0 : i32
    %c0_i32_1 = arith.constant 0 : i32
    return %c0_i32, %c0_i32_0 : i32, i32
  }
  func.func @transform_18(%arg0: i32, %arg1: memref<8xi32, #tpu.memory_space<smem>>) -> (i32, i32) {
    %c0_i32 = arith.constant 0 : i32
    %c0_i32_0 = arith.constant 0 : i32
    %c0_i32_1 = arith.constant 0 : i32
    return %c0_i32, %c0_i32_0 : i32, i32
  }
  func.func @transform_19(%arg0: i32, %arg1: memref<8xi32, #tpu.memory_space<smem>>) -> (i32, i32) {
    %c0_i32 = arith.constant 0 : i32
    %c0_i32_0 = arith.constant 0 : i32
    %c0_i32_1 = arith.constant 0 : i32
    return %c0_i32, %c0_i32_0 : i32, i32
  }
  func.func @transform_20(%arg0: i32, %arg1: memref<8xi32, #tpu.memory_space<smem>>) -> (i32, i32) {
    %c0_i32 = arith.constant 0 : i32
    %c0_i32_0 = arith.constant 0 : i32
    %c0_i32_1 = arith.constant 0 : i32
    return %c0_i32, %c0_i32_0 : i32, i32
  }
  func.func @transform_21(%arg0: i32, %arg1: memref<8xi32, #tpu.memory_space<smem>>) -> (i32, i32) {
    %c0_i32 = arith.constant 0 : i32
    %c0_i32_0 = arith.constant 0 : i32
    %c0_i32_1 = arith.constant 0 : i32
    return %c0_i32, %c0_i32_0 : i32, i32
  }
  func.func @transform_22(%arg0: i32, %arg1: memref<8xi32, #tpu.memory_space<smem>>) -> (i32, i32) {
    %c0_i32 = arith.constant 0 : i32
    %c0_i32_0 = arith.constant 0 : i32
    %c0_i32_1 = arith.constant 0 : i32
    return %c0_i32, %c0_i32_0 : i32, i32
  }
  func.func @transform_23(%arg0: i32, %arg1: memref<8xi32, #tpu.memory_space<smem>>) -> (i32, i32) {
    %c0_i32 = arith.constant 0 : i32
    %c0_i32_0 = arith.constant 0 : i32
    %c0_i32_1 = arith.constant 0 : i32
    return %c0_i32, %c0_i32_0 : i32, i32
  }
  func.func @transform_24(%arg0: i32, %arg1: memref<8xi32, #tpu.memory_space<smem>>) -> (i32, i32) {
    %c0_i32 = arith.constant 0 : i32
    %c0_i32_0 = arith.constant 0 : i32
    %c0_i32_1 = arith.constant 0 : i32
    return %c0_i32, %c0_i32_0 : i32, i32
  }
  func.func @transform_25(%arg0: i32, %arg1: memref<8xi32, #tpu.memory_space<smem>>) -> (i32, i32) {
    %c0_i32 = arith.constant 0 : i32
    %c0_i32_0 = arith.constant 0 : i32
    %c0_i32_1 = arith.constant 0 : i32
    return %c0_i32, %c0_i32_0 : i32, i32
  }
}

</mosaic_0001>

<llo_original>
// kernel: tpu_custom_call.1
$region0: #{tpu_custom_call.1}
  #allocation0 [shape = 'u32[]', space=smem, size = 0x4, offset = 0x4, fixed_abs, tag = 'smem constant byte address 0x4 - core index']
  #allocation1 [shape = 'u32[72,128]{1,0:T(1,128)}', space=vmem, size = 0x9000, scoped, tag = 'internal scratch']
  #allocation2 [shape = 'bf16[8,8]{1,0:T(8,128)(2,1)}', space=vmem, size = 0x800, scoped, tag = 'scratch operand']
  #allocation3 [shape = 's32[1]{0}', space=sflag, size = 0x4, scoped, tag = 'scratch operand']
  #allocation4 [shape = 's32[1]{0}', space=sflag, size = 0x4, scoped, tag = 'scoped memory for tpu_custom_call.1']
  #allocation5 [shape = 'u8[512]{0}', space=smem, size = 0x200, scoped, tag = 'prefetched SMEM operand 0']
  #allocation21 [shape = 's32[]', space=sflag, size = 0x4, offset = 0, fixed_abs, tag = 'sflag constant byte address 0x0 - dummy sync flag']
  %s0 = inlined_call_operand.vmem [shape: s32[8], index: 0, kind: input, shape index: {}]
  %s1 = inlined_call_operand.vmem [shape: f32[8,16], index: 1, kind: input, shape index: {}]
  %s2 = inlined_call_operand.vmem [shape: bf16[8,8], index: 2, kind: input, shape index: {}]
  %s3 = inlined_call_operand.vmem [shape: bf16[16,32], index: 3, kind: input, shape index: {}]
  %s4 = inlined_call_operand.vmem [shape: f32[1,32], index: 4, kind: input, shape index: {}]
  %s5 = inlined_call_operand.vmem [shape: bf16[32,32], index: 5, kind: input, shape index: {}]
  %s6 = inlined_call_operand.vmem [shape: f32[1,32], index: 6, kind: input, shape index: {}]
  %s7 = inlined_call_operand.vmem [shape: bf16[32,16], index: 7, kind: input, shape index: {}]
  %s8 = inlined_call_operand.hbm [shape: f32[1,16], index: 8, kind: input, shape index: {}]
  %s9 = inlined_call_operand.vmem [shape: bf16[16,8], index: 9, kind: input, shape index: {}]
  %s10 = inlined_call_operand.hbm [shape: f32[1,8], index: 10, kind: input, shape index: {}]
  %s11 = inlined_call_operand.hbm [shape: bf16[8,16], index: 11, kind: input, shape index: {}]
  %s12 = inlined_call_operand.hbm [shape: f32[1,16], index: 12, kind: input, shape index: {}]
  %s13 = inlined_call_operand.vmem [shape: bf16[16,32], index: 13, kind: input, shape index: {}]
  %s14 = inlined_call_operand.hbm [shape: f32[1,32], index: 14, kind: input, shape index: {}]
  %s15 = inlined_call_operand.vmem [shape: bf16[32,32], index: 15, kind: input, shape index: {}]
  %s16 = inlined_call_operand.hbm [shape: f32[1,32], index: 16, kind: input, shape index: {}]
  %s17 = inlined_call_operand.vmem [shape: bf16[32,16], index: 17, kind: input, shape index: {}]
  %s18 = inlined_call_operand.vmem [shape: f32[1,16], index: 18, kind: input, shape index: {}]
  %s19 = inlined_call_operand.hbm [shape: bf16[16,32], index: 19, kind: input, shape index: {}]
  %s20 = inlined_call_operand.vmem [shape: bf16[32,32], index: 20, kind: input, shape index: {}]
  %s21 = inlined_call_operand.vmem [shape: bf16[32,16], index: 21, kind: input, shape index: {}]
  %s22 = inlined_call_operand.vmem [shape: bf16[16,8], index: 22, kind: input, shape index: {}]
  %s23 = inlined_call_operand.vmem [shape: bf16[8,4], index: 23, kind: input, shape index: {}]
  %s24 = inlined_call_operand.vmem [shape: f32[4,8], index: 24, kind: input, shape index: {}]
  %s25 = inlined_call_operand.hbm [shape: f32[8,128], index: 25, kind: output, shape index: {0}]
  %s26 = inlined_call_operand.hbm [shape: f32[1,16], index: 26, kind: output, shape index: {1}]
  %27 = xla_tuple %s25, %s26
  %s28 = sld [smem:[#allocation0]]
  $region168: #{tpu_custom_call.1} parent=0
    _
  %s30 = ssub.s32 1, %s28
  %s31 = scalar_select 0, %s30, %s28
  %s33 = sshll.u32 %s0, 4
  %s34 = int_to_ptr.vmem [resolvable:$true] %s33
  %36 = dma.vmem_to_smem %s34, 16, [#allocation5], [#allocation4]
  %38 = dma.done [#allocation4], 16
  %39 = sfence
  $region1: #{tpu_custom_call.1} parent=0
    #allocation6 [shape = 'u8[512]{0}', space=vmem, size = 0x400, scoped, tag = 'input window, operand 8, single buffered']
    #allocation7 [shape = 's32[1]{0}', space=sflag, size = 0x4, scoped, tag = 'scoped memory for tpu_custom_call.1']
    #allocation8 [shape = 's32[1]{0}', space=sflag, size = 0x4, scoped, tag = 'scoped memory for tpu_custom_call.1']
    #allocation9 [shape = 'u8[512]{0}', space=vmem, size = 0x400, scoped, tag = 'input window, operand 10, single buffered']
    #allocation10 [shape = 's32[1]{0}', space=sflag, size = 0x4, scoped, tag = 'scoped memory for tpu_custom_call.1']
    #allocation11 [shape = 'u8[2048]{0}', space=vmem, size = 0x800, scoped, tag = 'input window, operand 11, single buffered']
    #allocation12 [shape = 'u8[512]{0}', space=vmem, size = 0x400, scoped, tag = 'input window, operand 12, single buffered']
    #allocation13 [shape = 's32[1]{0}', space=sflag, size = 0x4, scoped, tag = 'scoped memory for tpu_custom_call.1']
    #allocation14 [shape = 'u8[512]{0}', space=vmem, size = 0x400, scoped, tag = 'input window, operand 14, single buffered']
    #allocation15 [shape = 'u8[512]{0}', space=vmem, size = 0x400, scoped, tag = 'input window, operand 16, single buffered']
    #allocation16 [shape = 's32[1]{0}', space=sflag, size = 0x4, scoped, tag = 'scoped memory for tpu_custom_call.1']
    #allocation17 [shape = 'u8[4096]{0}', space=vmem, size = 0x1000, scoped, tag = 'input window, operand 19, single buffered']
    #allocation18 [shape = 'u8[4096]{0}', space=vmem, size = 0x1000, scoped, tag = 'output window, operand 0, single buffered']
    #allocation19 [shape = 'u8[512]{0}', space=vmem, size = 0x400, scoped, tag = 'output window, operand 1, single buffered']
    #allocation20 [shape = 's32[1]{0}', space=sflag, size = 0x4, scoped, tag = 'scoped memory for tpu_custom_call.1']
    %40 = vsyncpa [#allocation7], 0
    %41 = vsyncpa [#allocation10], 0
    %42 = vsyncpa [#allocation13], 0
    %43 = vsyncpa [#allocation16], 0
    %44 = vsyncpa [#allocation8], 0
    %45 = vsyncpa [#allocation20], 0
    // Predicated region
    $region2: #{tpu_custom_call.1} parent=1 // pred_check
      _
    $region3: #{tpu_custom_call.1} parent=1 // pred_check_branch
      %47 = sbr.rel (0) target = $region5
    $region4: #{tpu_custom_call.1} parent=1 // pred_region
      _
    $region5: #{tpu_custom_call.1} parent=1 // pred_fallthru
      _
    // Predicated region
    $region6: #{tpu_custom_call.1} parent=1 // pred_check
      _
    $region7: #{tpu_custom_call.1} parent=1 // pred_check_branch
      %49 = sbr.rel (0) target = $region9
    $region8: #{tpu_custom_call.1} parent=1 // pred_region
      _
    $region9: #{tpu_custom_call.1} parent=1 // pred_fallthru
      _
    // Predicated region
    $region10: #{tpu_custom_call.1} parent=1 // pred_check
      _
    $region11: #{tpu_custom_call.1} parent=1 // pred_check_branch
      %51 = sbr.rel (0) target = $region13
    $region12: #{tpu_custom_call.1} parent=1 // pred_region
      _
    $region13: #{tpu_custom_call.1} parent=1 // pred_fallthru
      _
    // Predicated region
    $region14: #{tpu_custom_call.1} parent=1 // pred_check
      _
    $region15: #{tpu_custom_call.1} parent=1 // pred_check_branch
      %53 = sbr.rel (0) target = $region17
    $region16: #{tpu_custom_call.1} parent=1 // pred_region
      _
    $region17: #{tpu_custom_call.1} parent=1 // pred_fallthru
      _
    // Predicated region
    $region18: #{tpu_custom_call.1} parent=1 // pred_check
      _
    $region19: #{tpu_custom_call.1} parent=1 // pred_check_branch
      %55 = sbr.rel (0) target = $region21
    $region20: #{tpu_custom_call.1} parent=1 // pred_region
      _
    $region21: #{tpu_custom_call.1} parent=1 // pred_fallthru
      _
    // Predicated region
    $region22: #{tpu_custom_call.1} parent=1 // pred_check
      _
    $region23: #{tpu_custom_call.1} parent=1 // pred_check_branch
      %57 = sbr.rel (0) target = $region25
    $region24: #{tpu_custom_call.1} parent=1 // pred_region
      _
    $region25: #{tpu_custom_call.1} parent=1 // pred_fallthru
      _
    // Predicated region
    $region26: #{tpu_custom_call.1} parent=1 // pred_check
      _
    $region27: #{tpu_custom_call.1} parent=1 // pred_check_branch
      %59 = sbr.rel (0) target = $region29
    $region28: #{tpu_custom_call.1} parent=1 // pred_region
      %61 = vsyncadd [#allocation7], 0
      %s63 = sshll.u32 %s8, 4
      %s64 = int_to_ptr.hbm [resolvable:$true] %s63
      %s65 = sshll.u32 [#allocation6], 4
      %s66 = int_to_ptr.vmem [resolvable:$true] %s65
      %68 = dma.hbm_to_vmem [thread:$0]  %s64, 16, %s66, [#allocation7]
    $region29: #{tpu_custom_call.1} parent=1 // pred_fallthru
      _
    // Predicated region
    $region30: #{tpu_custom_call.1} parent=1 // pred_check
      _
    $region31: #{tpu_custom_call.1} parent=1 // pred_check_branch
      %70 = sbr.rel (0) target = $region33
    $region32: #{tpu_custom_call.1} parent=1 // pred_region
      _
    $region33: #{tpu_custom_call.1} parent=1 // pred_fallthru
      _
    // Predicated region
    $region34: #{tpu_custom_call.1} parent=1 // pred_check
      _
    $region35: #{tpu_custom_call.1} parent=1 // pred_check_branch
      %72 = sbr.rel (0) target = $region37
    $region36: #{tpu_custom_call.1} parent=1 // pred_region
      %74 = vsyncadd [#allocation10], 0
      %s76 = sshll.u32 %s10, 4
      %s77 = int_to_ptr.hbm [resolvable:$true] %s76
      %s78 = sshll.u32 [#allocation9], 4
      %s79 = int_to_ptr.vmem [resolvable:$true] %s78
      %81 = dma.hbm_to_vmem [thread:$0]  %s77, 16, %s79, [#allocation10]
    $region37: #{tpu_custom_call.1} parent=1 // pred_fallthru
      _
    // Predicated region
    $region38: #{tpu_custom_call.1} parent=1 // pred_check
      _
    $region39: #{tpu_custom_call.1} parent=1 // pred_check_branch
      %83 = sbr.rel (0) target = $region41
    $region40: #{tpu_custom_call.1} parent=1 // pred_region
      %85 = vsyncadd [#allocation10], 0
      %s87 = sshll.u32 %s11, 4
      %s88 = int_to_ptr.hbm [resolvable:$true] %s87
      %s89 = sshll.u32 [#allocation11], 4
      %s90 = int_to_ptr.vmem [resolvable:$true] %s89
      %92 = dma.hbm_to_vmem [thread:$0]  %s88, 64, %s90, [#allocation10]
    $region41: #{tpu_custom_call.1} parent=1 // pred_fallthru
      _
    // Predicated region
    $region42: #{tpu_custom_call.1} parent=1 // pred_check
      _
    $region43: #{tpu_custom_call.1} parent=1 // pred_check_branch
      %94 = sbr.rel (0) target = $region45
    $region44: #{tpu_custom_call.1} parent=1 // pred_region
      %96 = vsyncadd [#allocation13], 0
      %s98 = sshll.u32 %s12, 4
      %s99 = int_to_ptr.hbm [resolvable:$true] %s98
      %s100 = sshll.u32 [#allocation12], 4
      %s101 = int_to_ptr.vmem [resolvable:$true] %s100
      %103 = dma.hbm_to_vmem [thread:$0]  %s99, 16, %s101, [#allocation13]
    $region45: #{tpu_custom_call.1} parent=1 // pred_fallthru
      _
    // Predicated region
    $region46: #{tpu_custom_call.1} parent=1 // pred_check
      _
    $region47: #{tpu_custom_call.1} parent=1 // pred_check_branch
      %105 = sbr.rel (0) target = $region49
    $region48: #{tpu_custom_call.1} parent=1 // pred_region
      _
    $region49: #{tpu_custom_call.1} parent=1 // pred_fallthru
      _
    // Predicated region
    $region50: #{tpu_custom_call.1} parent=1 // pred_check
      _
    $region51: #{tpu_custom_call.1} parent=1 // pred_check_branch
      %107 = sbr.rel (0) target = $region53
    $region52: #{tpu_custom_call.1} parent=1 // pred_region
      %109 = vsyncadd [#allocation13], 0
      %s111 = sshll.u32 %s14, 4
      %s112 = int_to_ptr.hbm [resolvable:$true] %s111
      %s113 = sshll.u32 [#allocation14], 4
      %s114 = int_to_ptr.vmem [resolvable:$true] %s113
      %116 = dma.hbm_to_vmem [thread:$0]  %s112, 16, %s114, [#allocation13]
    $region53: #{tpu_custom_call.1} parent=1 // pred_fallthru
      _
    // Predicated region
    $region54: #{tpu_custom_call.1} parent=1 // pred_check
      _
    $region55: #{tpu_custom_call.1} parent=1 // pred_check_branch
      %118 = sbr.rel (0) target = $region57
    $region56: #{tpu_custom_call.1} parent=1 // pred_region
      _
    $region57: #{tpu_custom_call.1} parent=1 // pred_fallthru
      _
    // Predicated region
    $region58: #{tpu_custom_call.1} parent=1 // pred_check
      _
    $region59: #{tpu_custom_call.1} parent=1 // pred_check_branch
      %120 = sbr.rel (0) target = $region61
    $region60: #{tpu_custom_call.1} parent=1 // pred_region
      %122 = vsyncadd [#allocation16], 0
      %s124 = sshll.u32 %s16, 4
      %s125 = int_to_ptr.hbm [resolvable:$true] %s124
      %s126 = sshll.u32 [#allocation15], 4
      %s127 = int_to_ptr.vmem [resolvable:$true] %s126
      %129 = dma.hbm_to_vmem [thread:$0]  %s125, 16, %s127, [#allocation16]
    $region61: #{tpu_custom_call.1} parent=1 // pred_fallthru
      _
    // Predicated region
    $region62: #{tpu_custom_call.1} parent=1 // pred_check
      _
    $region63: #{tpu_custom_call.1} parent=1 // pred_check_branch
      %131 = sbr.rel (0) target = $region65
    $region64: #{tpu_custom_call.1} parent=1 // pred_region
      _
    $region65: #{tpu_custom_call.1} parent=1 // pred_fallthru
      _
    // Predicated region
    $region66: #{tpu_custom_call.1} parent=1 // pred_check
      _
    $region67: #{tpu_custom_call.1} parent=1 // pred_check_branch
      %133 = sbr.rel (0) target = $region69
    $region68: #{tpu_custom_call.1} parent=1 // pred_region
      _
    $region69: #{tpu_custom_call.1} parent=1 // pred_fallthru
      _
    // Predicated region
    $region70: #{tpu_custom_call.1} parent=1 // pred_check
      _
    $region71: #{tpu_custom_call.1} parent=1 // pred_check_branch
      %135 = sbr.rel (0) target = $region73
    $region72: #{tpu_custom_call.1} parent=1 // pred_region
      %137 = vsyncadd [#allocation16], 0
      %s138 = sshll.u32 %s19, 4
      %s139 = int_to_ptr.hbm [resolvable:$true] %s138
      %s140 = sshll.u32 [#allocation17], 4
      %s141 = int_to_ptr.vmem [resolvable:$true] %s140
      %146 = dma.hbm_to_vmem [thread:$0]  %s139, 128, %s141, [#allocation16], 64, 64, 4
    $region73: #{tpu_custom_call.1} parent=1 // pred_fallthru
      _
    // Predicated region
    $region74: #{tpu_custom_call.1} parent=1 // pred_check
      _
    $region75: #{tpu_custom_call.1} parent=1 // pred_check_branch
      %148 = sbr.rel (0) target = $region77
    $region76: #{tpu_custom_call.1} parent=1 // pred_region
      _
    $region77: #{tpu_custom_call.1} parent=1 // pred_fallthru
      _
    // Predicated region
    $region78: #{tpu_custom_call.1} parent=1 // pred_check
      _
    $region79: #{tpu_custom_call.1} parent=1 // pred_check_branch
      %150 = sbr.rel (0) target = $region81
    $region80: #{tpu_custom_call.1} parent=1 // pred_region
      _
    $region81: #{tpu_custom_call.1} parent=1 // pred_fallthru
      _
    // Predicated region
    $region82: #{tpu_custom_call.1} parent=1 // pred_check
      _
    $region83: #{tpu_custom_call.1} parent=1 // pred_check_branch
      %152 = sbr.rel (0) target = $region85
    $region84: #{tpu_custom_call.1} parent=1 // pred_region
      _
    $region85: #{tpu_custom_call.1} parent=1 // pred_fallthru
      _
    // Predicated region
    $region86: #{tpu_custom_call.1} parent=1 // pred_check
      _
    $region87: #{tpu_custom_call.1} parent=1 // pred_check_branch
      %154 = sbr.rel (0) target = $region89
    $region88: #{tpu_custom_call.1} parent=1 // pred_region
      _
    $region89: #{tpu_custom_call.1} parent=1 // pred_fallthru
      _
    // Predicated region
    $region90: #{tpu_custom_call.1} parent=1 // pred_check
      _
    $region91: #{tpu_custom_call.1} parent=1 // pred_check_branch
      %156 = sbr.rel (0) target = $region93
    $region92: #{tpu_custom_call.1} parent=1 // pred_region
      _
    $region93: #{tpu_custom_call.1} parent=1 // pred_fallthru
      _
    // Predicated region
    $region94: #{tpu_custom_call.1} parent=1 // pred_check
      _
    $region95: #{tpu_custom_call.1} parent=1 // pred_check_branch
      %158 = sbr.rel (0) target = $region97
    $region96: #{tpu_custom_call.1} parent=1 // pred_region
      %160 = dma.done [#allocation7], 16
    $region97: #{tpu_custom_call.1} parent=1 // pred_fallthru
      _
    // Predicated region
    $region98: #{tpu_custom_call.1} parent=1 // pred_check
      _
    $region99: #{tpu_custom_call.1} parent=1 // pred_check_branch
      %162 = sbr.rel (0) target = $region101
    $region100: #{tpu_custom_call.1} parent=1 // pred_region
      %164 = dma.done [#allocation10], 16
    $region101: #{tpu_custom_call.1} parent=1 // pred_fallthru
      _
    // Predicated region
    $region102: #{tpu_custom_call.1} parent=1 // pred_check
      _
    $region103: #{tpu_custom_call.1} parent=1 // pred_check_branch
      %166 = sbr.rel (0) target = $region105
    $region104: #{tpu_custom_call.1} parent=1 // pred_region
      %168 = dma.done [#allocation10], 64
    $region105: #{tpu_custom_call.1} parent=1 // pred_fallthru
      _
    // Predicated region
    $region106: #{tpu_custom_call.1} parent=1 // pred_check
      _
    $region107: #{tpu_custom_call.1} parent=1 // pred_check_branch
      %170 = sbr.rel (0) target = $region109
    $region108: #{tpu_custom_call.1} parent=1 // pred_region
      %172 = dma.done [#allocation13], 16
    $region109: #{tpu_custom_call.1} parent=1 // pred_fallthru
      _
    // Predicated region
    $region110: #{tpu_custom_call.1} parent=1 // pred_check
      _
    $region111: #{tpu_custom_call.1} parent=1 // pred_check_branch
      %174 = sbr.rel (0) target = $region113
    $region112: #{tpu_custom_call.1} parent=1 // pred_region
      %176 = dma.done [#allocation13], 16
    $region113: #{tpu_custom_call.1} parent=1 // pred_fallthru
      _
    // Predicated region
    $region114: #{tpu_custom_call.1} parent=1 // pred_check
      _
    $region115: #{tpu_custom_call.1} parent=1 // pred_check_branch
      %178 = sbr.rel (0) target = $region117
    $region116: #{tpu_custom_call.1} parent=1 // pred_region
      %180 = dma.done [#allocation16], 16
    $region117: #{tpu_custom_call.1} parent=1 // pred_fallthru
      _
    // Predicated region
    $region118: #{tpu_custom_call.1} parent=1 // pred_check
      _
    $region119: #{tpu_custom_call.1} parent=1 // pred_check_branch
      %182 = sbr.rel (0) target = $region121
    $region120: #{tpu_custom_call.1} parent=1 // pred_region
      %184 = dma.done [#allocation16], 128
    $region121: #{tpu_custom_call.1} parent=1 // pred_fallthru
      _
    // Predicated region
    $region122: #{tpu_custom_call.1} parent=1 // pred_check
      _
    $region123: #{tpu_custom_call.1} parent=1 // pred_check_branch
      %187 = sbr.rel target = $region125
    $region124: #{tpu_custom_call.1} parent=1 // pred_region
      // Predicated region
      $region137: #{tpu_custom_call.1} parent=124 // pred_check
        _
      $region138: #{tpu_custom_call.1} parent=124 // pred_check_branch
        %203 = sbr.rel (0) target = $region140
      $region139: #{tpu_custom_call.1} parent=124 // pred_region
        %s205 = ssub.s32 16, 1
        loop: start=0, step=1, limit=1
        $region141: #{tpu_custom_call.1} parent=139 // loop_pre_header
          _
        $region142: #{tpu_custom_call.1} parent=139 // loop_header
          %s207 = sphi 0, %s211
          %p208 = scmp.ge.s32.totalorder %s207, 1
          %s212 = sphi %s2, %s2
          %s213 = sphi [#allocation2], [#allocation2]
        $region143: #{tpu_custom_call.1} parent=139 // loop_header_branch
          %210 = sbr.rel (%p208) target = $region147
        $region144: #{tpu_custom_call.1} parent=139 // loop_body
          %v214 = vld [vmem:[%s212] sm:%s205]
          %215 = vst [vmem:[%s213] sm:%s205] %v214
        $region145: #{tpu_custom_call.1} parent=139 // loop_footer
          %s211 = sadd.s32 1, %s207
        $region146: #{tpu_custom_call.1} parent=139 // loop_footer_branch
          %206 = sbr.rel target = $region142
        $region147: #{tpu_custom_call.1} parent=139 // loop_exit
          _
      $region140: #{tpu_custom_call.1} parent=124 // pred_fallthru
        _
    $region125: #{tpu_custom_call.1} parent=1 // pred_fallthru
      _
    // Predicated region
    $region126: #{tpu_custom_call.1} parent=1 // pred_check
      _
    $region127: #{tpu_custom_call.1} parent=1 // pred_check_branch
      %189 = sbr.rel (0) target = $region129
    $region128: #{tpu_custom_call.1} parent=1 // pred_region
      %s191 = ssub.s32 16, 1
      loop: start=0, step=1, limit=1
      $region130: #{tpu_custom_call.1} parent=128 // loop_pre_header
        _
      $region131: #{tpu_custom_call.1} parent=128 // loop_header
        %s193 = sphi 0, %s197
        %p194 = scmp.ge.s32.totalorder %s193, 1
        %s198 = sphi %s2, %s2
        %s199 = sphi [#allocation2], [#allocation2]
      $region132: #{tpu_custom_call.1} parent=128 // loop_header_branch
        %196 = sbr.rel (%p194) target = $region136
      $region133: #{tpu_custom_call.1} parent=128 // loop_body
        %v200 = vld [vmem:[%s198] sm:%s191]
        %201 = vst [vmem:[%s199] sm:%s191] %v200
      $region134: #{tpu_custom_call.1} parent=128 // loop_footer
        %s197 = sadd.s32 1, %s193
      $region135: #{tpu_custom_call.1} parent=128 // loop_footer_branch
        %192 = sbr.rel target = $region131
      $region136: #{tpu_custom_call.1} parent=128 // loop_exit
        _
    $region129: #{tpu_custom_call.1} parent=1 // pred_fallthru
      _
    // Predicated region
    $region148: #{tpu_custom_call.1} parent=1 // pred_check
      _
    $region149: #{tpu_custom_call.1} parent=1 // pred_check_branch
      %218 = sbr.rel (0) target = $region151
    $region150: #{tpu_custom_call.1} parent=1 // pred_region
      %219 = vsyncadd [#allocation3], 64
    $region151: #{tpu_custom_call.1} parent=1 // pred_fallthru
      _
    %v220 = vld [vmem:[%s1] sm:$0xff]
    %s221 = sld [smem:[#allocation5]]
    %s222 = scalar_lea.vmem %s1, %s221
    %v223 = vld [vmem:[%s222] sm:$0x1]
    %s224 = sld [smem:[#allocation5 + $0x1]]
    %s225 = scalar_lea.vmem %s1, %s224
    %v226 = vld [vmem:[%s225] sm:$0x1]
    %s227 = sld [smem:[#allocation5 + $0x2]]
    %s228 = scalar_lea.vmem %s1, %s227
    %v229 = vld [vmem:[%s228] sm:$0x1]
    %s230 = sld [smem:[#allocation5 + $0x3]]
    %s231 = scalar_lea.vmem %s1, %s230
    %v232 = vld [vmem:[%s231] sm:$0x1]
    %s233 = sld [smem:[#allocation5 + $0x4]]
    %s234 = scalar_lea.vmem %s1, %s233
    %v235 = vld [vmem:[%s234] sm:$0x1]
    %s236 = sld [smem:[#allocation5 + $0x5]]
    %s237 = scalar_lea.vmem %s1, %s236
    %v238 = vld [vmem:[%s237] sm:$0x1]
    %s239 = sld [smem:[#allocation5 + $0x6]]
    %s240 = scalar_lea.vmem %s1, %s239
    %v241 = vld [vmem:[%s240] sm:$0x1]
    %s242 = sld [smem:[#allocation5 + $0x7]]
    %s243 = scalar_lea.vmem %s1, %s242
    %v244 = vld [vmem:[%s243] sm:$0x1]
    %v246 = vrot.slane %v226, 7
    %v249 = vrot.slane %v229, 6
    %v252 = vrot.slane %v232, 5
    %v255 = vrot.slane %v235, 4
    %v258 = vrot.slane %v238, 3
    %v261 = vrot.slane %v241, 2
    %v264 = vrot.slane %v244, 1
    %vm266 = vcmask 1040384
    %v267 = vsel %vm266, %v223, %v246
    %vm268 = vcmask 1041408
    %v269 = vsel %vm268, %v267, %v249
    %vm270 = vcmask 1042432
    %v271 = vsel %vm270, %v269, %v252
    %vm272 = vcmask 1043456
    %v273 = vsel %vm272, %v271, %v255
    %vm274 = vcmask 1044480
    %v275 = vsel %vm274, %v273, %v258
    %vm276 = vcmask 1045504
    %v277 = vsel %vm276, %v275, %v261
    %vm278 = vcmask 1046528
    %v279 = vsel %vm278, %v277, %v264
    %v280 = vpack.c.bf16 %v279, %v220
    %v281 = vld [vmem:[%s3] sm:$0xf]
    %v282 = vld [vmem:[%s3 + $0x4] sm:$0xf]
    %v283 = vld [vmem:[%s4] sm:$0x1]
    %v285 = vperm.slane %v283, 0
    %v289 = vunpack.c.l.b16 %v281
    %v290 = vunpack.c.l.b16 %v282
    %v291 = vpack.c.b16 %v290, %v289
    %vm293 = vcmask 130048
    %v295 = vsel %vm293, %v280, 0
    %297 = vmatpush.bf16.msra.mxu0 0
    %298 = vmatpush.bf16.msra.mxu0 0
    %299 = vmatpush.bf16.msra.mxu0 0
    %300 = vmatpush.bf16.msra.mxu0 0
    %301 = vmatpush.bf16.msra.mxu0 0
    %302 = vmatpush.bf16.msra.mxu0 0
    %303 = vmatpush.bf16.msra.mxu0 0
    %304 = vmatpush.bf16.msra.mxu0 %v291
    %305 = vmatmul.bf16.gmra.mxu0 %v295
    %v306 = vpop.f32.mrf.mxu0
    %v307 = vadd.f32 %v285, %v306
    %v308 = vpop.f32.mrf.mxu0
    %v309 = vadd.f32 %v285, %v308
    %310 = vdwg.mxu0
    %v311 = vmax.f32 %v307, 0.0
    %v312 = vmax.f32 %v309, 0.0
    %v313 = vpack.c.bf16 %v312, %v311
    %v314 = vld [vmem:[%s5] sm:$0xf]
    %v315 = vld [vmem:[%s5 + $0x4] sm:$0xf]
    %v316 = vld [vmem:[%s5 + $0x8] sm:$0xf]
    %v317 = vld [vmem:[%s5 + $0xc] sm:$0xf]
    %v318 = vld [vmem:[%s6] sm:$0x1]
    %v320 = vperm.slane %v318, 0
    %v326 = vunpack.c.l.b16 %v314
    %v327 = vunpack.c.l.b16 %v315
    %v328 = vunpack.c.l.b16 %v316
    %v329 = vunpack.c.l.b16 %v317
    %v330 = vpack.c.b16 %v327, %v326
    %v331 = vpack.c.b16 %v329, %v328
    %vm334 = vcmask 261120
    %v336 = vsel %vm334, %v313, 0
    %338 = vmatpush.bf16.msra.mxu0 0
    %339 = vmatpush.bf16.msra.mxu0 0
    %340 = vmatpush.bf16.msra.mxu0 0
    %341 = vmatpush.bf16.msra.mxu0 0
    %342 = vmatpush.bf16.msra.mxu0 0
    %343 = vmatpush.bf16.msra.mxu0 0
    %344 = vmatpush.bf16.msra.mxu0 %v331
    %345 = vmatpush.bf16.msra.mxu0 %v330
    %346 = vmatmul.bf16.gmra.mxu0 %v336
    %v347 = vpop.f32.mrf.mxu0
    %v348 = vadd.f32 %v320, %v347
    %v349 = vpop.f32.mrf.mxu0
    %v350 = vadd.f32 %v320, %v349
    %351 = vdwg.mxu0
    %v352 = vmax.f32 %v348, 0.0
    %v353 = vmax.f32 %v350, 0.0
    %v354 = vpack.c.bf16 %v353, %v352
    %v355 = vld [vmem:[%s7] sm:$0xf]
    %v356 = vld [vmem:[%s7 + $0x4] sm:$0xf]
    %v357 = vld [vmem:[%s7 + $0x8] sm:$0xf]
    %v358 = vld [vmem:[%s7 + $0xc] sm:$0xf]
    %v359 = vld [vmem:[#allocation6] sm:$0x1]
    %v361 = vperm.slane %v359, 0
    %v367 = vunpack.c.l.b16 %v355
    %v368 = vunpack.c.l.b16 %v356
    %v369 = vunpack.c.l.b16 %v357
    %v370 = vunpack.c.l.b16 %v358
    %v371 = vpack.c.b16 %v368, %v367
    %v372 = vpack.c.b16 %v370, %v369
    %v376 = vsel %vm334, %v354, 0
    %378 = vmatpush.bf16.msra.mxu0 0
    %379 = vmatpush.bf16.msra.mxu0 0
    %380 = vmatpush.bf16.msra.mxu0 0
    %381 = vmatpush.bf16.msra.mxu0 0
    %382 = vmatpush.bf16.msra.mxu0 0
    %383 = vmatpush.bf16.msra.mxu0 0
    %384 = vmatpush.bf16.msra.mxu0 %v372
    %385 = vmatpush.bf16.msra.mxu0 %v371
    %386 = vmatmul.bf16.gmra.mxu0 %v376
    %v387 = vpop.f32.mrf.mxu0
    %v388 = vadd.f32 %v361, %v387
    %v389 = vpop.f32.mrf.mxu0
    %v390 = vadd.f32 %v361, %v389
    %391 = vdwg.mxu0
    %v392 = vmax.f32 %v388, 0.0
    %v393 = vmax.f32 %v390, 0.0
    %v394 = vpack.c.bf16 %v392, %v392
    %v395 = vld [vmem:[%s9] sm:$0xf]
    %v396 = vld [vmem:[%s9 + $0x4] sm:$0xf]
    %v397 = vld [vmem:[#allocation9] sm:$0x1]
    %v399 = vperm.slane %v397, 0
    %v403 = vunpack.c.l.b16 %v395
    %v404 = vunpack.c.l.b16 %v396
    %v405 = vpack.c.b16 %v404, %v403
    %v408 = vsel %vm293, %v394, 0
    %410 = vmatpush.bf16.msra.mxu0 0
    %411 = vmatpush.bf16.msra.mxu0 0
    %412 = vmatpush.bf16.msra.mxu0 0
    %413 = vmatpush.bf16.msra.mxu0 0
    %414 = vmatpush.bf16.msra.mxu0 0
    %415 = vmatpush.bf16.msra.mxu0 0
    %416 = vmatpush.bf16.msra.mxu0 0
    %417 = vmatpush.bf16.msra.mxu0 %v405
    %418 = vmatmul.bf16.gmra.mxu0 %v408
    %v419 = vpop.f32.mrf.mxu0
    %v420 = vadd.f32 %v399, %v419
    %v421 = vpop.f32.mrf.mxu0
    %422 = vdwg.mxu0
    %v423 = vpack.c.bf16 %v420, %v420
    %v424 = vld [vmem:[#allocation11] sm:$0xf]
    %v425 = vld [vmem:[#allocation12] sm:$0x1]
    %v427 = vperm.slane %v425, 0
    %vm429 = vcmask 64512
    %v431 = vsel %vm429, %v423, 0
    %v434 = vsel %vm272, %v424, 0
    %436 = vmatpush.bf16.msra.mxu0 0
    %437 = vmatpush.bf16.msra.mxu0 0
    %438 = vmatpush.bf16.msra.mxu0 0
    %439 = vmatpush.bf16.msra.mxu0 0
    %440 = vmatpush.bf16.msra.mxu0 0
    %441 = vmatpush.bf16.msra.mxu0 0
    %442 = vmatpush.bf16.msra.mxu0 0
    %443 = vmatpush.bf16.msra.mxu0 %v434
    %444 = vmatmul.bf16.gmra.mxu0 %v431
    %v445 = vpop.f32.mrf.mxu0
    %v446 = vadd.f32 %v427, %v445
    %v447 = vpop.f32.mrf.mxu0
    %448 = vdwg.mxu0
    %v449 = vmax.f32 %v446, 0.0
    %v450 = vpack.c.bf16 %v449, %v449
    %v451 = vld [vmem:[%s13] sm:$0xf]
    %v452 = vld [vmem:[%s13 + $0x4] sm:$0xf]
    %v453 = vld [vmem:[#allocation14] sm:$0x1]
    %v455 = vperm.slane %v453, 0
    %v459 = vunpack.c.l.b16 %v451
    %v460 = vunpack.c.l.b16 %v452
    %v461 = vpack.c.b16 %v460, %v459
    %v464 = vsel %vm293, %v450, 0
    %466 = vmatpush.bf16.msra.mxu0 0
    %467 = vmatpush.bf16.msra.mxu0 0
    %468 = vmatpush.bf16.msra.mxu0 0
    %469 = vmatpush.bf16.msra.mxu0 0
    %470 = vmatpush.bf16.msra.mxu0 0
    %471 = vmatpush.bf16.msra.mxu0 0
    %472 = vmatpush.bf16.msra.mxu0 0
    %473 = vmatpush.bf16.msra.mxu0 %v461
    %474 = vmatmul.bf16.gmra.mxu0 %v464
    %v475 = vpop.f32.mrf.mxu0
    %v476 = vadd.f32 %v455, %v475
    %v477 = vpop.f32.mrf.mxu0
    %478 = vdwg.mxu0
    %v479 = vmax.f32 %v476, 0.0
    %v480 = vpack.c.bf16 %v479, %v479
    %v481 = vld [vmem:[%s15] sm:$0xf]
    %v482 = vld [vmem:[%s15 + $0x4] sm:$0xf]
    %v483 = vld [vmem:[%s15 + $0x8] sm:$0xf]
    %v484 = vld [vmem:[%s15 + $0xc] sm:$0xf]
    %v485 = vld [vmem:[#allocation15] sm:$0x1]
    %v487 = vperm.slane %v485, 0
    %v493 = vunpack.c.l.b16 %v481
    %v494 = vunpack.c.l.b16 %v482
    %v495 = vunpack.c.l.b16 %v483
    %v496 = vunpack.c.l.b16 %v484
    %v497 = vpack.c.b16 %v494, %v493
    %v498 = vpack.c.b16 %v496, %v495
    %v502 = vsel %vm334, %v480, 0
    %504 = vmatpush.bf16.msra.mxu0 0
    %505 = vmatpush.bf16.msra.mxu0 0
    %506 = vmatpush.bf16.msra.mxu0 0
    %507 = vmatpush.bf16.msra.mxu0 0
    %508 = vmatpush.bf16.msra.mxu0 0
    %509 = vmatpush.bf16.msra.mxu0 0
    %510 = vmatpush.bf16.msra.mxu0 %v498
    %511 = vmatpush.bf16.msra.mxu0 %v497
    %512 = vmatmul.bf16.gmra.mxu0 %v502
    %v513 = vpop.f32.mrf.mxu0
    %v514 = vadd.f32 %v487, %v513
    %v515 = vpop.f32.mrf.mxu0
    %516 = vdwg.mxu0
    %v517 = vmax.f32 %v514, 0.0
    %v518 = vpack.c.bf16 %v517, %v517
    %v519 = vld [vmem:[%s17] sm:$0xf]
    %v520 = vld [vmem:[%s17 + $0x4] sm:$0xf]
    %v521 = vld [vmem:[%s17 + $0x8] sm:$0xf]
    %v522 = vld [vmem:[%s17 + $0xc] sm:$0xf]
    %v523 = vld [vmem:[%s18] sm:$0x1]
    %v525 = vperm.slane %v523, 0
    %v531 = vunpack.c.l.b16 %v519
    %v532 = vunpack.c.l.b16 %v520
    %v533 = vunpack.c.l.b16 %v521
    %v534 = vunpack.c.l.b16 %v522
    %v535 = vpack.c.b16 %v532, %v531
    %v536 = vpack.c.b16 %v534, %v533
    %v540 = vsel %vm334, %v518, 0
    %542 = vmatpush.bf16.msra.mxu0 0
    %543 = vmatpush.bf16.msra.mxu0 0
    %544 = vmatpush.bf16.msra.mxu0 0
    %545 = vmatpush.bf16.msra.mxu0 0
    %546 = vmatpush.bf16.msra.mxu0 0
    %547 = vmatpush.bf16.msra.mxu0 0
    %548 = vmatpush.bf16.msra.mxu0 %v536
    %549 = vmatpush.bf16.msra.mxu0 %v535
    %550 = vmatmul.bf16.gmra.mxu0 %v540
    %v551 = vpop.f32.mrf.mxu0
    %v552 = vadd.f32 %v525, %v551
    %v553 = vpop.f32.mrf.mxu0
    %554 = vdwg.mxu0
    %s555 = smul.u32 4, 1
    %s556 = smul.u32 %s555, 1
    %s557 = sshll.u32 %s556, 4
    %558 = dma.done [#allocation3], %s557
    %v559 = vld [vmem:[#allocation2] sm:$0xf]
    %v560 = vpack.c.bf16 %v220, %v220
    %v561 = vld [vmem:[#allocation17] sm:$0xf]
    %v562 = vld [vmem:[#allocation17 + $0x4] sm:$0xf]
    %v565 = vunpack.c.l.b16 %v561
    %v566 = vunpack.c.l.b16 %v562
    %v567 = vpack.c.b16 %v566, %v565
    %v570 = vsel %vm293, %v560, 0
    %572 = vmatpush.bf16.msra.mxu0 0
    %573 = vmatpush.bf16.msra.mxu0 0
    %574 = vmatpush.bf16.msra.mxu0 0
    %575 = vmatpush.bf16.msra.mxu0 0
    %576 = vmatpush.bf16.msra.mxu0 0
    %577 = vmatpush.bf16.msra.mxu0 0
    %578 = vmatpush.bf16.msra.mxu0 0
    %579 = vmatpush.bf16.msra.mxu0 %v567
    %580 = vmatmul.bf16.gmra.mxu0 %v570
    %v581 = vpop.f32.mrf.mxu0
    %v582 = vadd.f32 0.0, %v581
    %v583 = vpop.f32.mrf.mxu0
    %584 = vdwg.mxu0
    %v585 = vpack.c.bf16 %v582, %v582
    %v587 = vsel %vm429, %v559, 0
    %v590 = vsel %vm272, %v585, 0
    %592 = vmatpush.bf16.msra.mxu0 0
    %593 = vmatpush.bf16.msra.mxu0 0
    %594 = vmatpush.bf16.msra.mxu0 0
    %595 = vmatpush.bf16.msra.mxu0 0
    %596 = vmatpush.bf16.msra.mxu0 0
    %597 = vmatpush.bf16.msra.mxu0 0
    %598 = vmatpush.bf16.msra.mxu0 0
    %599 = vmatpush.bf16.msra.mxu0 %v590
    %600 = vmatmul.bf16.gmra.mxu0 %v587
    %v601 = vpop.f32.mrf.mxu0
    %v602 = vadd.f32 0.0, %v601
    %v603 = vpop.f32.mrf.mxu0
    %604 = vdwg.mxu0
    %v605 = vmax.f32 %v602, 0.0
    %v606 = vmul.f32 %v605, 0.5
    %v607 = vmul.f32 %v311, 0.5
    %v608 = vadd.f32 %v606, %v607
    %v609 = vmul.f32 %v312, 0.5
    %v610 = vadd.f32 %v606, %v609
    %v611 = vpack.c.bf16 %v610, %v608
    %v612 = vld [vmem:[%s20] sm:$0xf]
    %v613 = vld [vmem:[%s20 + $0x4] sm:$0xf]
    %v614 = vld [vmem:[%s20 + $0x8] sm:$0xf]
    %v615 = vld [vmem:[%s20 + $0xc] sm:$0xf]
    %v620 = vunpack.c.l.b16 %v612
    %v621 = vunpack.c.l.b16 %v613
    %v622 = vunpack.c.l.b16 %v614
    %v623 = vunpack.c.l.b16 %v615
    %v624 = vpack.c.b16 %v621, %v620
    %v625 = vpack.c.b16 %v623, %v622
    %v629 = vsel %vm334, %v611, 0
    %631 = vmatpush.bf16.msra.mxu0 0
    %632 = vmatpush.bf16.msra.mxu0 0
    %633 = vmatpush.bf16.msra.mxu0 0
    %634 = vmatpush.bf16.msra.mxu0 0
    %635 = vmatpush.bf16.msra.mxu0 0
    %636 = vmatpush.bf16.msra.mxu0 0
    %637 = vmatpush.bf16.msra.mxu0 %v625
    %638 = vmatpush.bf16.msra.mxu0 %v624
    %639 = vmatmul.bf16.gmra.mxu0 %v629
    %v640 = vpop.f32.mrf.mxu0
    %v641 = vadd.f32 0.0, %v640
    %v642 = vpop.f32.mrf.mxu0
    %v643 = vadd.f32 0.0, %v642
    %644 = vdwg.mxu0
    %646 = vrot.lane.b32.xlu0 %v643, 32
    %v647 = vpop.permute.xlu0 %646
    %v649 = vsel %vm334, %v641, %v647
    %v650 = vpack.c.bf16 %v649, %v649
    %v652 = vsel %vm272, %v650, 0
    %654 = vmatpush.bf16.msra.mxu0 0
    %655 = vmatpush.bf16.msra.mxu0 0
    %656 = vmatpush.bf16.msra.mxu0 0
    %657 = vmatpush.bf16.msra.mxu0 0
    %658 = vmatpush.bf16.msra.mxu0 0
    %659 = vmatpush.bf16.msra.mxu0 0
    %660 = vmatpush.bf16.msra.mxu0 0
    %661 = vmatpush.bf16.msra.mxu0 %v652
    %662 = vmatmul.bf16.gmra.mxu0 %v587
    %v663 = vpop.f32.mrf.mxu0
    %v664 = vadd.f32 0.0, %v663
    %v665 = vpop.f32.mrf.mxu0
    %666 = vdwg.mxu0
    %v667 = vmax.f32 %v664, 0.0
    %v668 = vmul.f32 %v667, 0.5
    %v669 = vmul.f32 %v352, 0.5
    %v670 = vadd.f32 %v668, %v669
    %v671 = vmul.f32 %v353, 0.5
    %673 = vrot.lane.b32.xlu0 %v671, 32
    %v674 = vpop.permute.xlu0 %673
    %v676 = vadd.f32 %v668, %v674
    %678 = vrot.lane.b32.xlu0 %v676, 96
    %v679 = vpop.permute.xlu0 %678
    %v681 = vpack.c.bf16 %v679, %v670
    %v682 = vld [vmem:[%s21] sm:$0xf]
    %v683 = vld [vmem:[%s21 + $0x4] sm:$0xf]
    %v684 = vld [vmem:[%s21 + $0x8] sm:$0xf]
    %v685 = vld [vmem:[%s21 + $0xc] sm:$0xf]
    %v690 = vunpack.c.l.b16 %v682
    %v691 = vunpack.c.l.b16 %v683
    %v692 = vunpack.c.l.b16 %v684
    %v693 = vunpack.c.l.b16 %v685
    %v694 = vpack.c.b16 %v691, %v690
    %v695 = vpack.c.b16 %v693, %v692
    %v699 = vsel %vm334, %v681, 0
    %701 = vmatpush.bf16.msra.mxu0 0
    %702 = vmatpush.bf16.msra.mxu0 0
    %703 = vmatpush.bf16.msra.mxu0 0
    %704 = vmatpush.bf16.msra.mxu0 0
    %705 = vmatpush.bf16.msra.mxu0 0
    %706 = vmatpush.bf16.msra.mxu0 0
    %707 = vmatpush.bf16.msra.mxu0 %v695
    %708 = vmatpush.bf16.msra.mxu0 %v694
    %709 = vmatmul.bf16.gmra.mxu0 %v699
    %v710 = vpop.f32.mrf.mxu0
    %v711 = vadd.f32 0.0, %v710
    %v712 = vpop.f32.mrf.mxu0
    %v713 = vadd.f32 0.0, %v712
    %714 = vdwg.mxu0
    %716 = vrot.lane.b32.xlu0 %v713, 16
    %v717 = vpop.permute.xlu0 %716
    %v719 = vsel %vm293, %v711, %v717
    %v720 = vpack.c.bf16 %v719, %v719
    %v722 = vsel %vm272, %v720, 0
    %724 = vmatpush.bf16.msra.mxu0 0
    %725 = vmatpush.bf16.msra.mxu0 0
    %726 = vmatpush.bf16.msra.mxu0 0
    %727 = vmatpush.bf16.msra.mxu0 0
    %728 = vmatpush.bf16.msra.mxu0 0
    %729 = vmatpush.bf16.msra.mxu0 0
    %730 = vmatpush.bf16.msra.mxu0 0
    %731 = vmatpush.bf16.msra.mxu0 %v722
    %732 = vmatmul.bf16.gmra.mxu0 %v587
    %v733 = vpop.f32.mrf.mxu0
    %v734 = vadd.f32 0.0, %v733
    %v735 = vpop.f32.mrf.mxu0
    %736 = vdwg.mxu0
    %v737 = vmax.f32 %v734, 0.0
    %v738 = vmul.f32 %v737, 0.5
    %v739 = vmul.f32 %v392, 0.5
    %v740 = vadd.f32 %v738, %v739
    %v741 = vmul.f32 %v393, 0.5
    %743 = vrot.lane.b32.xlu0 %v741, 16
    %v744 = vpop.permute.xlu0 %743
    %v746 = vadd.f32 %v738, %v744
    %v747 = vpack.c.bf16 %v740, %v740
    %v748 = vld [vmem:[%s22] sm:$0xf]
    %v749 = vld [vmem:[%s22 + $0x4] sm:$0xf]
    %v752 = vunpack.c.l.b16 %v748
    %v753 = vunpack.c.l.b16 %v749
    %v754 = vpack.c.b16 %v753, %v752
    %v757 = vsel %vm293, %v747, 0
    %759 = vmatpush.bf16.msra.mxu0 0
    %760 = vmatpush.bf16.msra.mxu0 0
    %761 = vmatpush.bf16.msra.mxu0 0
    %762 = vmatpush.bf16.msra.mxu0 0
    %763 = vmatpush.bf16.msra.mxu0 0
    %764 = vmatpush.bf16.msra.mxu0 0
    %765 = vmatpush.bf16.msra.mxu0 0
    %766 = vmatpush.bf16.msra.mxu0 %v754
    %767 = vmatmul.bf16.gmra.mxu0 %v757
    %v768 = vpop.f32.mrf.mxu0
    %v769 = vadd.f32 0.0, %v768
    %v770 = vpop.f32.mrf.mxu0
    %771 = vdwg.mxu0
    %v772 = vpack.c.bf16 %v769, %v769
    %v774 = vsel %vm272, %v772, 0
    %776 = vmatpush.bf16.msra.mxu0 0
    %777 = vmatpush.bf16.msra.mxu0 0
    %778 = vmatpush.bf16.msra.mxu0 0
    %779 = vmatpush.bf16.msra.mxu0 0
    %780 = vmatpush.bf16.msra.mxu0 0
    %781 = vmatpush.bf16.msra.mxu0 0
    %782 = vmatpush.bf16.msra.mxu0 0
    %783 = vmatpush.bf16.msra.mxu0 %v774
    %784 = vmatmul.bf16.gmra.mxu0 %v587
    %v785 = vpop.f32.mrf.mxu0
    %v786 = vadd.f32 0.0, %v785
    %v787 = vpop.f32.mrf.mxu0
    %788 = vdwg.mxu0
    %v789 = vmax.f32 %v786, 0.0
    %v790 = vmul.f32 %v789, 0.5
    %v791 = vmul.f32 %v420, 0.5
    %v792 = vadd.f32 %v790, %v791
    %v793 = vpack.c.bf16 %v792, %v792
    %v794 = vld [vmem:[%s23] sm:$0xf]
    %v796 = vsel %vm429, %v793, 0
    %v799 = vsel %vm272, %v794, 0
    %801 = vmatpush.bf16.msra.mxu0 0
    %802 = vmatpush.bf16.msra.mxu0 0
    %803 = vmatpush.bf16.msra.mxu0 0
    %804 = vmatpush.bf16.msra.mxu0 0
    %805 = vmatpush.bf16.msra.mxu0 0
    %806 = vmatpush.bf16.msra.mxu0 0
    %807 = vmatpush.bf16.msra.mxu0 0
    %808 = vmatpush.bf16.msra.mxu0 %v799
    %809 = vmatmul.bf16.gmra.mxu0 %v796
    %v810 = vpop.f32.mrf.mxu0
    %v811 = vadd.f32 0.0, %v810
    %v812 = vpop.f32.mrf.mxu0
    %813 = vdwg.mxu0
    %v814 = vpack.c.bf16 %v811, %v811
    %v816 = vsel %vm272, %v814, 0
    %818 = vmatpush.bf16.msra.mxu0 0
    %819 = vmatpush.bf16.msra.mxu0 0
    %820 = vmatpush.bf16.msra.mxu0 0
    %821 = vmatpush.bf16.msra.mxu0 0
    %822 = vmatpush.bf16.msra.mxu0 0
    %823 = vmatpush.bf16.msra.mxu0 0
    %824 = vmatpush.bf16.msra.mxu0 0
    %825 = vmatpush.bf16.msra.mxu0 %v816
    %826 = vmatmul.bf16.gmra.mxu0 %v587
    %v827 = vpop.f32.mrf.mxu0
    %v828 = vadd.f32 0.0, %v827
    %v829 = vpop.f32.mrf.mxu0
    %830 = vdwg.mxu0
    %vm831 = vcmask 31744
    %v832 = vsel %vm831, %v828, -inf
    %833 = vmax.xlane.f32.xlu0 %v832
    %v834 = vpop.xlane.xlu0 %833
    %v835 = vsub.f32 %v828, %v834
    %v836 = vmul.f32 %v835, 1.442695
    %v837 = vpow.pop %v836
    %v838 = vsel %vm831, %v837, 0.0
    %839 = vadd.xlane.f32.xlu0 %v838
    %v840 = vpop.xlane.xlu0 %839
    %v841 = vrcp.pop %v840
    %v842 = vmul.f32 %v837, %v841
    %v843 = vsel %vm293, %v740, 0.0
    %v844 = vrot.slane %v843, 4
    %v845 = vadd.f32 %v843, %v844
    %v846 = vrot.slane %v845, 2
    %v847 = vadd.f32 %v845, %v846
    %v848 = vrot.slane %v847, 1
    %v849 = vadd.f32 %v847, %v848
    %v850 = vrcp.pop 8.0
    %v851 = vmul.f32 8.0, %v850
    %v852 = vsub.f32 1.0, %v851
    %v853 = vmul.f32 %v850, %v852
    %v854 = vadd.f32 %v850, %v853
    %vm855 = vweird.f32 %v850
    %v856 = vsel %vm855, %v850, %v854
    %v857 = vmul.f32 %v849, %v856
    %v858 = vand.u32 2147483647, %v857
    %v859 = vsub.f32 0.0, %v858
    %v860 = vmul.f32 %v859, 1.442695
    %v861 = vpow.pop %v860
    %v862 = vadd.f32 %v861, 1.0
    %v863 = vrcp.pop %v862
    %vm864 = vcmp.ge.f32.partialorder %v857, 0.0
    %v865 = vmul.f32 %v861, %v863
    %v866 = vsel %vm864, %v863, %v865
    %v867 = vld [vmem:[%s24] sm:$0xf]
    %v868 = vmul.f32 %v420, %v420
    %v869 = vsel %vm429, %v868, 0.0
    %870 = vadd.xlane.f32.xlu0 %v869
    %v871 = vpop.xlane.xlu0 %870
    %v872 = vmul.f32 %v867, %v867
    %vm873 = vcmask 60416
    %v874 = vsel %vm873, %v872, 0.0
    %875 = vadd.xlane.f32.xlu0 %v874
    %v876 = vpop.xlane.xlu0 %875
    %877 = vxpose.xlu0.b32.start [1/16] %v876, 128
    %878 = vxpose.xlu0.b32.cont [2/16] 0.0, 128
    %879 = vxpose.xlu0.b32.cont [3/16] 0.0, 128
    %880 = vxpose.xlu0.b32.cont [4/16] 0.0, 128
    %881 = vxpose.xlu0.b32.cont [5/16] 0.0, 128
    %882 = vxpose.xlu0.b32.cont [6/16] 0.0, 128
    %883 = vxpose.xlu0.b32.cont [7/16] 0.0, 128
    %884 = vxpose.xlu0.b32.cont [8/16] 0.0, 128
    %885 = vxpose.xlu0.b32.cont [9/16] 0.0, 128
    %886 = vxpose.xlu0.b32.cont [10/16] 0.0, 128
    %887 = vxpose.xlu0.b32.cont [11/16] 0.0, 128
    %888 = vxpose.xlu0.b32.cont [12/16] 0.0, 128
    %889 = vxpose.xlu0.b32.cont [13/16] 0.0, 128
    %890 = vxpose.xlu0.b32.cont [14/16] 0.0, 128
    %891 = vxpose.xlu0.b32.cont [15/16] 0.0, 128
    %892 = vxpose.xlu0.b32.end [16/16] 0.0, 128
    %v893 = vpop.trf.xlu0
    %v894 = vpop.trf.xlu0
    %v895 = vpop.trf.xlu0
    %v896 = vpop.trf.xlu0
    %v897 = vpop.trf.xlu0
    %v898 = vpop.trf.xlu0
    %v899 = vpop.trf.xlu0
    %v900 = vpop.trf.xlu0
    %v901 = vpop.trf.xlu0
    %v902 = vpop.trf.xlu0
    %v903 = vpop.trf.xlu0
    %v904 = vpop.trf.xlu0
    %v905 = vpop.trf.xlu0
    %v906 = vpop.trf.xlu0
    %v907 = vpop.trf.xlu0
    %v908 = vpop.trf.xlu0
    %v910 = vsel %vm429, %v420, 0
    %v913 = vsel %vm429, %v867, 0
    %915 = vmatpush.xpose.msra.mxu0 0.0
    %916 = vmatpush.xpose.msra.mxu0 0.0
    %917 = vmatpush.xpose.msra.mxu0 0.0
    %918 = vmatpush.xpose.msra.mxu0 0.0
    %919 = vmatpush.xpose.msra.mxu0 0.0
    %920 = vmatpush.xpose.msra.mxu0 0.0
    %921 = vmatpush.xpose.msra.mxu0 0.0
    %922 = vmatpush.xpose.msra.mxu0 0.0
    %923 = vmatpush.xpose.msra.mxu0 0.0
    %924 = vmatpush.xpose.msra.mxu0 0.0
    %925 = vmatpush.xpose.msra.mxu0 0.0
    %926 = vmatpush.xpose.msra.mxu0 0.0
    %927 = vmatpush.xpose.msra.mxu0 0.0
    %928 = vmatpush.xpose.msra.mxu0 0.0
    %929 = vmatpush.xpose.msra.mxu0 0.0
    %930 = vmatpush.xpose.msra.mxu0 %v913
    %931 = vmatmul.f32.gmra.mxu0 %v910
    %v932 = vpop.f32.mrf.mxu0
    %v933 = vadd.f32 0.0, %v932
    %934 = vdwg.mxu0
    %v935 = vperm.slane %v893, 0
    %v936 = vadd.f32 %v871, %v935
    %v937 = vmul.f32 %v933, 2.0
    %v938 = vsub.f32 %v936, %v937
    %v939 = vmax.f32 %v938, 0.0
    %v940 = vadd.f32 %v939, 1.0
    %v941 = vrcp.pop %v940
    %v942 = vsel %vm831, %v941, 0.0
    %943 = vadd.xlane.f32.xlu0 %v942
    %v944 = vpop.xlane.xlu0 %943
    %v945 = vrcp.pop %v944
    %v946 = vmul.f32 %v941, %v945
    %948 = vrot.lane.b32.xlu0 %v842, 4
    %v949 = vpop.permute.xlu0 %948
    %952 = vrot.lane.b32.xlu0 %v946, 8
    %v953 = vpop.permute.xlu0 %952
    %955 = vrot.lane.b32.xlu0 %v420, 12
    %v956 = vpop.permute.xlu0 %955
    %959 = vrot.lane.b32.xlu0 %v740, 20
    %v960 = vpop.permute.xlu0 %959
    %963 = vrot.lane.b32.xlu0 %v746, 20
    %v964 = vpop.permute.xlu0 %963
    %967 = vrot.lane.b32.xlu0 %v552, 52
    %v968 = vpop.permute.xlu0 %967
    %v970 = vsel %vm831, %v828, %v949
    %v971 = vsel %vm429, %v970, %v953
    %vm972 = vcmask 97280
    %v973 = vsel %vm972, %v971, %v956
    %vm974 = vcmask 162816
    %v975 = vsel %vm974, %v973, %v960
    %vm976 = vcmask 293888
    %v977 = vsel %vm976, %v975, %v964
    %vm978 = vcmask 424960
    %v979 = vsel %vm978, %v977, %v968
    %vm980 = vcmask 556032
    %v981 = vsel %vm980, %v979, 0.0
    %982 = vst [vmem:[#allocation18] sm:$0xff] %v981
    %vm983 = vcmask 122880
    %984 = vst.msk [vmem:[#allocation19] sm:$0x1] %vm983, %v866
    // Predicated region
    $region152: #{tpu_custom_call.1} parent=1 // pred_check
      _
    $region153: #{tpu_custom_call.1} parent=1 // pred_check_branch
      %986 = sbr.rel (0) target = $region155
    $region154: #{tpu_custom_call.1} parent=1 // pred_region
      %988 = vsyncadd [#allocation8], 0
      %s990 = sshll.u32 [#allocation18], 4
      %s991 = int_to_ptr.vmem [resolvable:$true] %s990
      %s992 = sshll.u32 %s25, 4
      %s993 = int_to_ptr.hbm [resolvable:$true] %s992
      %995 = dma.vmem_to_hbm [thread:$0]  %s991, 128, %s993, [#allocation8]
    $region155: #{tpu_custom_call.1} parent=1 // pred_fallthru
      _
    // Predicated region
    $region156: #{tpu_custom_call.1} parent=1 // pred_check
      _
    $region157: #{tpu_custom_call.1} parent=1 // pred_check_branch
      %997 = sbr.rel (0) target = $region159
    $region158: #{tpu_custom_call.1} parent=1 // pred_region
      %999 = vsyncadd [#allocation20], 0
      %s1001 = sshll.u32 [#allocation19], 4
      %s1002 = int_to_ptr.vmem [resolvable:$true] %s1001
      %s1003 = sshll.u32 %s26, 4
      %s1004 = int_to_ptr.hbm [resolvable:$true] %s1003
      %1006 = dma.vmem_to_hbm [thread:$0]  %s1002, 16, %s1004, [#allocation20]
    $region159: #{tpu_custom_call.1} parent=1 // pred_fallthru
      _
    // Predicated region
    $region160: #{tpu_custom_call.1} parent=1 // pred_check
      _
    $region161: #{tpu_custom_call.1} parent=1 // pred_check_branch
      %1008 = sbr.rel (0) target = $region163
    $region162: #{tpu_custom_call.1} parent=1 // pred_region
      %1010 = dma.done [#allocation8], 128
    $region163: #{tpu_custom_call.1} parent=1 // pred_fallthru
      _
    // Predicated region
    $region164: #{tpu_custom_call.1} parent=1 // pred_check
      _
    $region165: #{tpu_custom_call.1} parent=1 // pred_check_branch
      %1012 = sbr.rel (0) target = $region167
    $region166: #{tpu_custom_call.1} parent=1 // pred_region
      %1014 = dma.done [#allocation20], 16
    $region167: #{tpu_custom_call.1} parent=1 // pred_fallthru
      _
    %1015 = vsyncpa [#allocation7], 1
    %1016 = vsyncpa [#allocation10], 1
    %1017 = vsyncpa [#allocation13], 1
    %1018 = vsyncpa [#allocation16], 1
    %1019 = vsyncpa [#allocation8], 1
    %1020 = vsyncpa [#allocation20], 1
  %1021 = vsyncmov [#allocation3]
  %s1022 = vpop.sfrf %1021
  %p1023 = scmp.eq.s32.totalorder %s1022, 0
  %p1024 = pneg %p1023
  %1026 = shalt.err (%p1024)

</llo_original>
